<compile_context>
chip_gen: v7x
topology: tpu7x:2x2x1
jax: 0.10.0
libtpu: 0.0.40
codegen_flags: <defaults>
</compile_context>

<pallas_src>
import functools
from typing import NamedTuple

import jax
import jax.numpy as jnp
from jax import lax
from jax.experimental import pallas as pl
from jax.experimental.pallas import tpu as pltpu


_PALLAS_MIN_NODES = 512   # below this, XLA fusion beats Mosaic launch + pipeline setup
_SLAB_WIDTH = 128         # lane-dense output slab width (multiple of 128 lanes)


def _round_up(x, m):
    return -(-x // m) * m


def _vmem_capacity_bytes():
    try:
        info = pltpu.get_tpu_info()
        cap = int(getattr(info, "vmem_capacity_bytes", 0))
        if cap > 0:
            return cap
    except Exception:
        pass
    return 128 * 1024 * 1024   # v5e / v6e physical VMEM


def _choose_row_tile(n):
    """Row tile + vmem limit derived from the actual tile footprint and chip VMEM."""
    cap = _vmem_capacity_bytes()
    mw_bytes = n * _SLAB_WIDTH * 2                        # resident MW (bf16, single-buffered)
    per_row = 2 * n * 2 + 2 * _SLAB_WIDTH * 4 + 2 * 4     # 2x bf16 A stripe + 2x out + 2x dinv
    budget = int(cap * 0.45)                              # stay well under half of per-TC VMEM (v7x: 64 MiB)
    tm = max(budget - mw_bytes, 8 * per_row) // per_row
    tm = max(8, min(1024, (tm // 8) * 8))
    # guarantee >= 4 row stripes on the single 'parallel' axis so both v7x TCs get work
    tm = min(tm, max(8, _round_up(-(-n // 4), 8)))
    footprint = mw_bytes + tm * per_row
    vmem_limit = min(int(cap * 0.85), max(footprint + (8 << 20), 32 << 20))
    return int(tm), int(vmem_limit)


class PreparedGraph(NamedTuple):
    a: jax.Array          # (n_pad, n) bf16: A + I, UNnormalized ({0,1,2}); padded rows are 0
    dinv: jax.Array       # (n,)      f32 : 1/sqrt(degree), column half of the normalization
    dinv_rows: jax.Array  # (n_pad,1) f32 : row half of the normalization, 0 in padded rows
    n: int
    row_tile: int
    vmem_limit: int


def prepare_graph(edge_index, n):
    """Build A (+I) ONCE per graph: bf16, row-padded, reused by both GCN layers."""
    tm, vmem_limit = _choose_row_tile(n)
    n_pad = _round_up(n, tm)
    rows = jnp.concatenate([edge_index[0], edge_index[1]])
    cols = jnp.concatenate([edge_index[1], edge_index[0]])
    a = jnp.zeros((n_pad, n), jnp.bfloat16)
    a = a.at[rows, cols].set(1.0)                   # one fused scatter for both edge directions
    diag = jnp.arange(n)
    a = a.at[diag, diag].add(1.0)                   # A + I (torch ref: pre-existing self loop -> 2)
    deg = jnp.sum(a, axis=1, dtype=jnp.float32)     # exact: A only holds {0, 1, 2}
    dinv_rows = jnp.where(deg > 0.0, lax.rsqrt(jnp.maximum(deg, 1e-12)), 0.0)[:, None]
    return PreparedGraph(a, dinv_rows[:n, 0], dinv_rows, n, tm, vmem_limit)


# ----------------------------------------------------------------------------
# Pallas kernel: one GCN layer stripe  act(dinv_rows * (A_stripe @ MW))
# ----------------------------------------------------------------------------

def _gcn_stripe_kernel(dinv_ref, a_ref, mw_ref, o_ref, *, apply_relu):
    # (tm, N) bf16 @ (N, 128) bf16 -> f32 accumulation on the MXU: one matmul per stripe.
    h = jnp.dot(a_ref[...], mw_ref[...], preferred_element_type=jnp.float32)
    h = h * dinv_ref[...]                 # row half of D A D (VPU, hidden under the A DMA)
    if apply_relu:
        h = jnp.maximum(h, 0.0)
    o_ref[...] = h.astype(o_ref.dtype)    # lane-dense (tm, 128) store


def _resident_spec(block_shape):
    # Grid-invariant operand (constant index_map): single-buffer it — it is never
    # re-fetched, so double-buffering only burns VMEM.  Fall back gracefully if this
    # jax version lacks BlockSpec(pipeline_mode=...).
    try:
        return pl.BlockSpec(block_shape, lambda i: (0, 0), pipeline_mode=pl.Buffered(1))
    except (AttributeError, TypeError):
        return pl.BlockSpec(block_shape, lambda i: (0, 0))


def gcn_layer(g: PreparedGraph, m, w, *, apply_relu, out_dtype):
    """One GCN propagation layer act(D A D @ M @ W), reassociated as act(D (A (D M W)))."""
    n, dout = g.n, w.shape[1]

    # Tiny (N, Din) @ (Din, Dout) done by XLA; fold the column half of the normalization here.
    mw = jnp.dot(m.astype(jnp.float32), w.astype(jnp.float32),
                 preferred_element_type=jnp.float32)
    mw = mw * g.dinv[:, None]

    if n < _PALLAS_MIN_NODES:
        # Plain-XLA fallback: at these sizes Mosaic launch/pipeline setup dominates.
        h = jnp.dot(g.a[:n].astype(jnp.float32), mw) * g.dinv[:, None]
        if apply_relu:
            h = jnp.maximum(h, 0.0)
        return h.astype(out_dtype)

    dout_pad = _round_up(dout, _SLAB_WIDTH)
    if dout_pad != dout:
        mw = jnp.pad(mw, ((0, 0), (0, dout_pad - dout)))   # lane-dense output slab
    mw_bf = mw.astype(jnp.bfloat16)

    tm = g.row_tile
    n_pad = g.a.shape[0]

    out = pl.pallas_call(
        functools.partial(_gcn_stripe_kernel, apply_relu=apply_relu),
        grid=(n_pad // tm,),
        in_specs=[
            pl.BlockSpec((tm, 1), lambda i: (i, 0)),        # dinv row scale
            pl.BlockSpec((tm, n), lambda i: (i, 0)),        # A row stripe (streamed from HBM)
            _resident_spec((n, dout_pad)),                  # MW, VMEM-resident, single-buffered
        ],
        out_specs=pl.BlockSpec((tm, dout_pad), lambda i: (i, 0)),
        out_shape=jax.ShapeDtypeStruct((n_pad, dout_pad), out_dtype),
        compiler_params=pltpu.CompilerParams(
            dimension_semantics=("parallel",),
            vmem_limit_bytes=g.vmem_limit,
        ),
    )(g.dinv_rows, g.a, mw_bf)
    return out[:n, :dout]


def fused_encoders(g: PreparedGraph, x, priv_params, shared_params):
    """Private VAE encoder + shared GCN encoder fused: A is streamed once per layer.

    Layer 1: h1 = relu(A_norm @ X @ [W1_priv | W1_shared])               (N, 2*H1) bf16
    Layer 2: block-diagonal weights -> one pass over A yields all heads:
             [mu_priv | logvar_priv | enc1_shared | enc2_shared]         (N, 4*H2) f32
    """
    w1p, w2p, w3p = priv_params
    w1s, w2s, w3s = shared_params
    h1, h2 = w1p.shape[1], w2p.shape[1]

    w1cat = jnp.concatenate([w1p, w1s], axis=1)                        # (F, 2*H1)
    zeros = jnp.zeros((h1, 2 * h2), w2p.dtype)
    wcat2 = jnp.concatenate(
        [jnp.concatenate([w2p, w3p, zeros], axis=1),                   # private rows
         jnp.concatenate([zeros, w2s, w3s], axis=1)], axis=0)          # shared rows

    h1cat = gcn_layer(g, x, w1cat, apply_relu=True, out_dtype=jnp.bfloat16)    # (N, 2*H1)
    slab = gcn_layer(g, h1cat, wcat2, apply_relu=False, out_dtype=jnp.float32)  # (N, 4*H2)

    mu_p = slab[:, 0:h2]
    logvar_p = slab[:, h2:2 * h2]
    enc1_s = slab[:, 2 * h2:3 * h2]
    enc2_s = slab[:, 3 * h2:4 * h2]
    return mu_p, logvar_p, enc1_s, enc2_s


# ----------------------------------------------------------------------------
# Small ops left to XLA (launch overhead would dominate a dedicated Mosaic kernel)
# ----------------------------------------------------------------------------

def diff_loss(a, b):
    # Torch semantics: x / (||x||_2 + 1e-6); contraction on axis 0 (no explicit .T).
    an = a / (jnp.sqrt(jnp.sum(a * a, axis=1, keepdims=True)) + 1e-6)
    bn = b / (jnp.sqrt(jnp.sum(b * b, axis=1, keepdims=True)) + 1e-6)
    g = lax.dot_general(an, bn, (((0,), (0,)), ((), ())),
                        preferred_element_type=jnp.float32)
    return jnp.mean(g * g)


def edge_scores(z, idx_i, idx_j):
    # Inner-product decoder evaluated only at the consumed (i, j) pairs.
    return jnp.sum(z[idx_i] * z[idx_j], axis=-1)


def cls_model(x, w1, b1, w2, b2):
    h = jnp.maximum(x @ w1 + b1, 0.0)
    return jax.nn.sigmoid(h @ w2 + b2)


def discriminator(x, w, b):
    return jax.nn.sigmoid(x @ w + b)


def global_mean_pool(x, batch, num_graphs):
    one = jax.nn.one_hot(batch, num_graphs, dtype=x.dtype)      # (N, G)
    s = one.T @ x
    cnt = jnp.maximum(jnp.sum(one, axis=0)[:, None], 1.0)
    return s / cnt


def bce(p, y):
    p = jnp.clip(p, 1e-12, 1.0 - 1e-12)
    return jnp.mean(-(y * jnp.log(p) + (1.0 - y) * jnp.log(1.0 - p)))


def bce_with_logits(x, y):
    return jnp.mean(jnp.maximum(x, 0.0) - x * y + jnp.log1p(jnp.exp(-jnp.abs(x))))


def recon_loss(preds, labels, mu, logvar, n_nodes, norm):
    cost = norm * bce_with_logits(preds, labels)
    kld = -0.5 / n_nodes * jnp.mean(
        jnp.sum(1.0 + 2.0 * logvar - mu ** 2 - jnp.exp(logvar) ** 2, axis=1))
    return cost + kld


def get_loss_inputs(edge_index, n_nodes, key):
    # TODO(synk): original get_loss_inputs() source not provided; deterministic
    # negative sampling + GAE-style norm / pos_weight here (may sample positives).
    e = edge_index.shape[1]
    neg = jax.random.randint(key, (2, e), 0, n_nodes)
    adj_label = jnp.concatenate(
        [jnp.ones((e,), jnp.float32), jnp.zeros((e,), jnp.float32)])
    norm = n_nodes * n_nodes / float((n_nodes * n_nodes - e) * 2)
    pos_weight = float(n_nodes * n_nodes - e) / float(e)
    return neg, adj_label, norm, pos_weight


# ----------------------------------------------------------------------------
# ASN_GC forward
# ----------------------------------------------------------------------------

def asn_gc_forward(params, src, tgt, coeff, num_classes, num_graphs, alpha=1.0):
    feats_s, edge_s, batch_s, labels_s = src
    feats_t, edge_t, batch_t = tgt
    n_s, n_t = feats_s.shape[0], feats_t.shape[0]

    # Adjacency prepared ONCE per graph (bf16, padded); normalization folded into the kernel.
    g_s = prepare_graph(edge_s, n_s)
    g_t = prepare_graph(edge_t, n_t)

    # Fused private + shared encoders: A is streamed once per GCN layer per graph.
    # TODO(synk): GCNModelVAE reparameterize noise omitted (eps = 0 -> recovered == mu),
    # since the exact class source was not provided.
    mu_s, logvar_s, enc_s1, enc_s2 = fused_encoders(
        g_s, feats_s, params['priv_s'], params['shared'])
    mu_t, logvar_t, enc_t1, enc_t2 = fused_encoders(
        g_t, feats_t, params['priv_t'], params['shared'])
    recovered_s, recovered_t = mu_s, mu_t
    z_s, z_t = enc_s1, enc_t1   # TODO(synk): GCN class returns (z, enc1, enc2); z := enc1

    x_ds_batch = global_mean_pool(enc_s1, batch_s, num_graphs)
    x_dt_batch = global_mean_pool(enc_t1, batch_t, num_graphs)

    labels_onehot = jax.nn.one_hot(labels_s, num_classes, dtype=jnp.float32)
    src_logits = cls_model(x_ds_batch, *params['cls'])
    clf_loss = bce(src_logits, labels_onehot)

    d_loss = diff_loss(mu_s, enc_s1) + diff_loss(mu_t, enc_t1)

    # Inner-product decoder evaluated only at the edge / negative pairs actually used.
    z_cat_s = jnp.concatenate([recovered_s, z_s], axis=1)
    z_cat_t = jnp.concatenate([recovered_t, z_t], axis=1)

    mu_cat_s = jnp.concatenate([mu_s, enc_s1], axis=1)
    mu_cat_t = jnp.concatenate([mu_t, enc_t1], axis=1)
    logvar_cat_s = jnp.concatenate([logvar_s, enc_s2], axis=1)
    logvar_cat_t = jnp.concatenate([logvar_t, enc_t2], axis=1)

    neg_s, adj_label_s, norm_s, _ = get_loss_inputs(edge_s, n_s, jax.random.PRNGKey(11))
    neg_t, adj_label_t, norm_t, _ = get_loss_inputs(edge_t, n_t, jax.random.PRNGKey(12))

    recover_s_pos = edge_scores(z_cat_s, edge_s[0], edge_s[1])
    recover_s_neg = edge_scores(z_cat_s, neg_s[0], neg_s[1])
    recover_t_pos = edge_scores(z_cat_t, edge_t[0], edge_t[1])
    recover_t_neg = edge_scores(z_cat_t, neg_t[0], neg_t[1])
    recover_s_pos_neg = jnp.concatenate([recover_s_pos, recover_s_neg])
    recover_t_pos_neg = jnp.concatenate([recover_t_pos, recover_t_neg])

    recon_s = recon_loss(recover_s_pos_neg, adj_label_s, mu_cat_s, logvar_cat_s,
                         n_nodes=n_s, norm=norm_s)
    recon_t = recon_loss(recover_t_pos_neg, adj_label_t, mu_cat_t, logvar_cat_t,
                         n_nodes=n_t * 2, norm=norm_t)
    recon = recon_s + recon_t

    # ReverseLayerF is identity in the forward pass
    src_dom = discriminator(x_ds_batch, *params['disc']).reshape(-1)
    tgt_dom = discriminator(x_dt_batch, *params['disc']).reshape(-1)
    domain = bce(src_dom, jnp.zeros_like(src_dom)) + bce(tgt_dom, jnp.ones_like(tgt_dom))

    return (clf_loss
            + coeff['diff'] * d_loss
            + coeff['recon'] * recon
            + coeff['domain'] * domain)


# ----------------------------------------------------------------------------
# Deterministic parameter init + example inputs
# ----------------------------------------------------------------------------

def init_params(key, feat_dim, h1, h2, num_classes):
    ks = jax.random.split(key, 16)
    w = lambda k, s: (jax.random.normal(k, s, jnp.float32) * 0.1)
    return {
        'priv_s': (w(ks[0], (feat_dim, h1)), w(ks[1], (h1, h2)), w(ks[2], (h1, h2))),
        'priv_t': (w(ks[3], (feat_dim, h1)), w(ks[4], (h1, h2)), w(ks[5], (h1, h2))),
        'shared': (w(ks[6], (feat_dim, h1)), w(ks[7], (h1, h2)), w(ks[8], (h1, h2))),
        'cls': (w(ks[9], (h2, 16)), jnp.zeros((1, 16), jnp.float32),
                w(ks[10], (16, num_classes)), jnp.zeros((1, num_classes), jnp.float32)),
        'disc': (w(ks[11], (h2, 1)), jnp.zeros((1, 1), jnp.float32)),
    }


if __name__ == "__main__":
    FEAT, H1, H2, C = 16, 32, 8, 4
    N_S, N_T, E, G = 1024, 1024, 4096, 4   # large enough to exercise the Pallas path

    key = jax.random.PRNGKey(0)
    k = jax.random.split(key, 8)

    feats_s = jax.random.normal(k[0], (N_S, FEAT), jnp.float32)
    feats_t = jax.random.normal(k[1], (N_T, FEAT), jnp.float32)
    edge_s = jax.random.randint(k[2], (2, E), 0, N_S)
    edge_t = jax.random.randint(k[3], (2, E), 0, N_T)
    batch_s = jnp.repeat(jnp.arange(G), N_S // G)
    batch_t = jnp.repeat(jnp.arange(G), N_T // G)
    labels_s = jax.random.randint(k[4], (G,), 0, C)

    params = init_params(k[5], FEAT, H1, H2, C)
    coeff = {'diff': 0.5, 'recon': 0.1, 'domain': 1.0}

    # ---- validate the bf16 Pallas encoder path against a plain f32 XLA reference ----
    g_s = prepare_graph(edge_s, N_S)
    mu_p, logvar_p, e1, e2 = fused_encoders(g_s, feats_s, params['priv_s'], params['shared'])
    slab_pl = jnp.concatenate([mu_p, logvar_p, e1, e2], axis=1)

    w1p, w2p, w3p = params['priv_s']
    w1s, w2s, w3s = params['shared']
    a_norm = g_s.dinv[:, None] * g_s.a[:N_S].astype(jnp.float32) * g_s.dinv[None, :]
    w1cat_r = jnp.concatenate([w1p, w1s], axis=1)
    zeros_r = jnp.zeros((H1, 2 * H2), jnp.float32)
    wcat2_r = jnp.concatenate([jnp.concatenate([w2p, w3p, zeros_r], axis=1),
                               jnp.concatenate([zeros_r, w2s, w3s], axis=1)], axis=0)
    h1_ref = jnp.maximum(a_norm @ (feats_s @ w1cat_r), 0.0)
    slab_ref = a_norm @ (h1_ref @ wcat2_r)
    err = float(jnp.max(jnp.abs(slab_pl - slab_ref)))
    scale = float(jnp.max(jnp.abs(slab_ref))) + 1e-6
    assert err <= 0.1 * scale + 0.02, (err, scale)   # generous bf16 tolerance

    # ---- full forward pass ----
    loss = asn_gc_forward(
        params,
        (feats_s, edge_s, batch_s, labels_s),
        (feats_t, edge_t, batch_t),
        coeff, num_classes=C, num_graphs=G, alpha=1.0)
    jax.block_until_ready(loss)
    assert jnp.isfinite(loss)
    print("KERNEL_OK")
</pallas_src>

<mosaic_0001>
module attributes {stable_mosaic.version = 11 : i64} {
  func.func @_gcn_stripe_kernel(%arg0: i32, %arg1: memref<256x1xf32, #tpu.memory_space<vmem>>, %arg2: memref<256x1024xbf16, #tpu.memory_space<vmem>>, %arg3: memref<1024x128xbf16, #tpu.memory_space<vmem>>, %arg4: memref<256x128xbf16, #tpu.memory_space<vmem>>) attributes {dimension_semantics = [#tpu.dimension_semantics<parallel>], iteration_bounds = array<i64: 4>, scalar_prefetch = 0 : i64, scratch_operands = 0 : i64, tpu.core_type = #tpu.core_type<tc>, window_params = [{transform_indices = @transform_0, window_bounds = array<i64: 256, 1>}, {transform_indices = @transform_1, window_bounds = array<i64: 256, 1024>}, {pipeline_mode = #tpu.pipeline_mode<synchronous>, transform_indices = @transform_2, window_bounds = array<i64: 1024, 128>}, {transform_indices = @transform_3, window_bounds = array<i64: 256, 128>}]} {
    %c0 = arith.constant 0 : index
    %c0_0 = arith.constant 0 : index
    %0 = vector.load %arg2[%c0, %c0_0] : memref<256x1024xbf16, #tpu.memory_space<vmem>>, vector<256x1024xbf16>
    %c0_1 = arith.constant 0 : index
    %c0_2 = arith.constant 0 : index
    %1 = vector.load %arg3[%c0_1, %c0_2] : memref<1024x128xbf16, #tpu.memory_space<vmem>>, vector<1024x128xbf16>
    %cst = arith.constant dense<0.000000e+00> : vector<256x128xf32>
    %2 = tpu.matmul %0, %1, %cst {dimension_numbers = #tpu.dot_dimension_numbers<[1], [0], [0], [1], [0, 0, 1, 1], [], []>} : vector<256x1024xbf16>, vector<1024x128xbf16>, vector<256x128xf32> -> vector<256x128xf32>
    %c0_3 = arith.constant 0 : index
    %c0_4 = arith.constant 0 : index
    %3 = vector.load %arg1[%c0_3, %c0_4] : memref<256x1xf32, #tpu.memory_space<vmem>>, vector<256x1xf32>
    %4 = vector.broadcast %3 : vector<256x1xf32> to vector<256x128xf32>
    %5 = arith.mulf %2, %4 : vector<256x128xf32>
    %cst_5 = arith.constant 0.000000e+00 : f32
    %6 = vector.broadcast %cst_5 : f32 to vector<256x128xf32>
    %7 = arith.maximumf %5, %6 : vector<256x128xf32>
    %8 = arith.truncf %7 : vector<256x128xf32> to vector<256x128xbf16>
    %c0_6 = arith.constant 0 : index
    %c0_7 = arith.constant 0 : index
    %9 = vector.load %arg4[%c0_6, %c0_7] : memref<256x128xbf16, #tpu.memory_space<vmem>>, vector<256x128xbf16>
    tpu.vector_store %arg4[%c0_6, %c0_7], %8 {strides = array<i32>} : memref<256x128xbf16, #tpu.memory_space<vmem>>, vector<256x128xbf16>,
    return
  }
  func.func @transform_0(%arg0: i32) -> (i32, i32) {
    %c0_i32 = arith.constant 0 : i32
    %c0_i32_0 = arith.constant 0 : i32
    return %arg0, %c0_i32 : i32, i32
  }
  func.func @transform_1(%arg0: i32) -> (i32, i32) {
    %c0_i32 = arith.constant 0 : i32
    %c0_i32_0 = arith.constant 0 : i32
    return %arg0, %c0_i32 : i32, i32
  }
  func.func @transform_2(%arg0: i32) -> (i32, i32) {
    %c0_i32 = arith.constant 0 : i32
    %c0_i32_0 = arith.constant 0 : i32
    %c0_i32_1 = arith.constant 0 : i32
    return %c0_i32, %c0_i32_0 : i32, i32
  }
  func.func @transform_3(%arg0: i32) -> (i32, i32) {
    %c0_i32 = arith.constant 0 : i32
    %c0_i32_0 = arith.constant 0 : i32
    return %arg0, %c0_i32 : i32, i32
  }
}

</mosaic_0001>

<llo_original>
// kernel: tpu_custom_call.1
$region0: #{tpu_custom_call.1}
  #allocation0 [shape = 'u32[]', space=smem, size = 0x4, offset = 0x4, fixed_abs, tag = 'smem constant byte address 0x4 - core index']
  #allocation1 [shape = 'u32[144,128]{1,0:T(1,128)}', space=vmem, size = 0x12000, scoped, tag = 'internal scratch']
  %s0 = inlined_call_operand.vmem [shape: f32[1024,1], index: 0, kind: input, shape index: {}]
  %s1 = inlined_call_operand.hbm [shape: bf16[1024,1024], index: 1, kind: input, shape index: {}]
  %s2 = inlined_call_operand.hbm [shape: bf16[1024,128], index: 2, kind: input, shape index: {}]
  %s3 = inlined_call_operand.hbm [shape: bf16[1024,128], index: 3, kind: output, shape index: {}]
  %s4 = sld [smem:[#allocation0]]
  $region53: #{tpu_custom_call.1} parent=0
    _
  %s6 = ssub.s32 1, %s4
  %s7 = scalar_select 0, %s6, %s4
  $region1: #{tpu_custom_call.1} parent=0
    #allocation2 [shape = 'u8[1048576]{0}', space=vmem, size = 0x100000, scoped, tag = 'input window, operand 1']
    #allocation3 [shape = 's32[2]{0}', space=sflag, size = 0x8, scoped, tag = 'scoped memory for tpu_custom_call.1']
    #allocation4 [shape = 's32[2]{0}', space=sflag, size = 0x8, scoped, tag = 'scoped memory for tpu_custom_call.1']
    #allocation5 [shape = 'u8[262144]{0}', space=vmem, size = 0x40000, scoped, tag = 'input window, operand 2, single buffered']
    #allocation6 [shape = 's32[1]{0}', space=sflag, size = 0x4, scoped, tag = 'scoped memory for tpu_custom_call.1']
    #allocation7 [shape = 'u8[131072]{0}', space=vmem, size = 0x20000, scoped, tag = 'output window, operand 0']
    %8 = vsyncpa [#allocation3], 0
    %s9 = scalar_lea.sflag [#allocation3], 1
    %10 = vsyncpa %s9, 0
    %11 = vsyncpa [#allocation6], 0
    %12 = vsyncpa [#allocation4], 0
    %s13 = scalar_lea.sflag [#allocation4], 1
    %14 = vsyncpa %s13, 0
    loop: start=0, step=1, limit=6
    $region2: #{tpu_custom_call.1} parent=1 // loop_pre_header
      _
    $region3: #{tpu_custom_call.1} parent=1 // loop_header
      %s16 = sphi 0, %s20
      %p17 = scmp.ge.s32.totalorder %s16, 6
      %s26 = sphi 0, %s28
      %s29 = sphi 0, %s26
      %s30 = sphi 0, %s29
      %s46 = sphi 0, %s30
      %s52 = sphi 0, %s54
      %s55 = sphi 0, %s52
      %s56 = sphi 0, %s55
      %s72 = sphi 0, %s56
      %s76 = sphi 0, %s76
      %s78 = sphi 0, %s76
      %s79 = sphi 0, %s78
      %s93 = sphi 0, %s79
      %s99 = sphi 0, %s101
      %s102 = sphi 0, %s99
      %s103 = sphi 0, %s102
      %s119 = sphi 0, %s103
    $region4: #{tpu_custom_call.1} parent=1 // loop_header_branch
      %19 = sbr.rel (%p17) target = $region8
    $region5: #{tpu_custom_call.1} parent=1 // loop_body
      %s21 = ssub.s32 %s16, 1
      %s22 = ssub.s32 %s16, 2
      %s23 = sadd.s32 %s16, 1
      %s24 = ssub.s32 %s16, %s23
      %p25 = scmp.eq.s32.totalorder %s24, 0
      %s27 = sadd.s32 %s26, 1
      %s28 = scalar_select %p25, %s26, %s27
      %p31 = pneg %p25
      %p32 = scmp.eq.s32.totalorder %s16, 3
      %p33 = por %p31, %p32
      %p34 = scmp.ne.s32.totalorder %s26, %s29
      %p35 = scmp.eq.s32.totalorder %s16, 0
      %p36 = por %p34, %p35
      %p37 = scmp.ne.s32.totalorder %s26, %s29
      %p38 = scmp.eq.s32.totalorder %s21, 3
      %p39 = por %p37, %p38
      %p40 = scmp.ne.s32.totalorder %s29, %s30
      %p41 = scmp.eq.s32.totalorder %s21, 0
      %p42 = por %p40, %p41
      %p43 = scmp.ne.s32.totalorder %s29, %s30
      %p44 = scmp.eq.s32.totalorder %s22, 3
      %p45 = por %p43, %p44
      %p47 = scmp.ne.s32.totalorder %s30, %s46
      %p48 = scmp.eq.s32.totalorder %s22, 0
      %p49 = por %p47, %p48
      %s50 = ssub.s32 %s16, %s23
      %p51 = scmp.eq.s32.totalorder %s50, 0
      %s53 = sadd.s32 %s52, 1
      %s54 = scalar_select %p51, %s52, %s53
      %p57 = pneg %p51
      %p58 = scmp.eq.s32.totalorder %s16, 3
      %p59 = por %p57, %p58
      %p60 = scmp.ne.s32.totalorder %s52, %s55
      %p61 = scmp.eq.s32.totalorder %s16, 0
      %p62 = por %p60, %p61
      %p63 = scmp.ne.s32.totalorder %s52, %s55
      %p64 = scmp.eq.s32.totalorder %s21, 3
      %p65 = por %p63, %p64
      %p66 = scmp.ne.s32.totalorder %s55, %s56
      %p67 = scmp.eq.s32.totalorder %s21, 0
      %p68 = por %p66, %p67
      %p69 = scmp.ne.s32.totalorder %s55, %s56
      %p70 = scmp.eq.s32.totalorder %s22, 3
      %p71 = por %p69, %p70
      %p73 = scmp.ne.s32.totalorder %s56, %s72
      %p74 = scmp.eq.s32.totalorder %s22, 0
      %p75 = por %p73, %p74
      %s77 = sadd.s32 %s76, 1
      %p80 = scmp.eq.s32.totalorder %s16, 3
      %p81 = scmp.ne.s32.totalorder %s76, %s78
      %p82 = scmp.eq.s32.totalorder %s16, 0
      %p83 = por %p81, %p82
      %p84 = scmp.ne.s32.totalorder %s76, %s78
      %p85 = scmp.eq.s32.totalorder %s21, 3
      %p86 = por %p84, %p85
      %p87 = scmp.ne.s32.totalorder %s78, %s79
      %p88 = scmp.eq.s32.totalorder %s21, 0
      %p89 = por %p87, %p88
      %p90 = scmp.ne.s32.totalorder %s78, %s79
      %p91 = scmp.eq.s32.totalorder %s22, 3
      %p92 = por %p90, %p91
      %p94 = scmp.ne.s32.totalorder %s79, %s93
      %p95 = scmp.eq.s32.totalorder %s22, 0
      %p96 = por %p94, %p95
      %s97 = ssub.s32 %s16, %s23
      %p98 = scmp.eq.s32.totalorder %s97, 0
      %s100 = sadd.s32 %s99, 1
      %s101 = scalar_select %p98, %s99, %s100
      %p104 = pneg %p98
      %p105 = scmp.eq.s32.totalorder %s16, 3
      %p106 = por %p104, %p105
      %p107 = scmp.ne.s32.totalorder %s99, %s102
      %p108 = scmp.eq.s32.totalorder %s16, 0
      %p109 = por %p107, %p108
      %p110 = scmp.ne.s32.totalorder %s99, %s102
      %p111 = scmp.eq.s32.totalorder %s21, 3
      %p112 = por %p110, %p111
      %p113 = scmp.ne.s32.totalorder %s102, %s103
      %p114 = scmp.eq.s32.totalorder %s21, 0
      %p115 = por %p113, %p114
      %p116 = scmp.ne.s32.totalorder %s102, %s103
      %p117 = scmp.eq.s32.totalorder %s22, 3
      %p118 = por %p116, %p117
      %p120 = scmp.ne.s32.totalorder %s103, %s119
      %p121 = scmp.eq.s32.totalorder %s22, 0
      %p122 = por %p120, %p121
      %p123 = scmp.le.s32.totalorder 1, %s16
      %p124 = scmp.lt.s32.totalorder %s16, 5
      %p125 = pnand %p123, %p124
      %p126 = pneg %p125
      // Predicated region
      $region9: #{tpu_custom_call.1} parent=5 // pred_check
        _
      $region10: #{tpu_custom_call.1} parent=5 // pred_check_branch
        %128 = sbr.rel (%p125) target = $region12
      $region11: #{tpu_custom_call.1} parent=5 // pred_region
        %s129 = ssub.s32 %s16, 1
        // Predicated region
        $region13: #{tpu_custom_call.1} parent=11 // pred_check
          %p130 = pneg %p89
        $region14: #{tpu_custom_call.1} parent=11 // pred_check_branch
          %132 = sbr.rel (%p130) target = $region16
        $region15: #{tpu_custom_call.1} parent=11 // pred_region
          %s134 = ssub.s32 8192, 8192
          %135 = vsyncadd [#allocation6], %s134
          %s136 = sshll.u32 [#allocation5], 4
          %s137 = int_to_ptr.vmem [resolvable:$true] %s136
          %142 = dma.hbm_to_vmem [thread:$0]  %s2, 8192, %s137, [#allocation6], 64, 64, 4
        $region16: #{tpu_custom_call.1} parent=11 // pred_fallthru
          _
      $region12: #{tpu_custom_call.1} parent=5 // pred_fallthru
        _
      %p143 = scmp.lt.s32.totalorder %s16, 4
      // Predicated region
      $region17: #{tpu_custom_call.1} parent=5 // pred_check
        %p144 = pneg %p143
      $region18: #{tpu_custom_call.1} parent=5 // pred_check_branch
        %146 = sbr.rel (%p144) target = $region20
      $region19: #{tpu_custom_call.1} parent=5 // pred_region
        // Predicated region
        $region21: #{tpu_custom_call.1} parent=19 // pred_check
          %p147 = pneg %p36
        $region22: #{tpu_custom_call.1} parent=19 // pred_check_branch
          %149 = sbr.rel (%p147) target = $region24
        $region23: #{tpu_custom_call.1} parent=19 // pred_region
          %s150 = smul.u32 32, %s16
          %p151 = scmp.lt.s32.totalorder %s150, 127
          %s152 = scalar_select %p151, %s150, 127
          %s153 = smul.addr %s152, 8
          %s154 = scalar_lea.vmem %s0, %s153
          %s155 = smul.u32 32, %s16
        $region24: #{tpu_custom_call.1} parent=19 // pred_fallthru
          _
        // Predicated region
        $region25: #{tpu_custom_call.1} parent=19 // pred_check
          %p156 = pneg %p62
        $region26: #{tpu_custom_call.1} parent=19 // pred_check_branch
          %158 = sbr.rel (%p156) target = $region28
        $region27: #{tpu_custom_call.1} parent=19 // pred_region
          %s159 = sand.u32 %s52, 1
          %s160 = scalar_lea.sflag [#allocation3], %s159
          %s161 = sand.u32 %s52, 1
          %s162 = smul.addr %s161, 1024
          %s163 = scalar_lea.vmem [#allocation2], %s162
          %s164 = smul.u32 32, %s16
          %s166 = ssub.s32 16384, 16384
          %167 = vsyncadd %s160, %s166
          %s168 = smul.addr %s164, 8
          %s169 = smul.addr %s168, 64
          %s170 = scalar_lea.hbm %s1, %s169
          %s171 = sshll.u32 %s163, 4
          %s172 = int_to_ptr.vmem [resolvable:$true] %s171
          %177 = dma.hbm_to_vmem [thread:$0]  %s170, 16384, %s172, %s160, 512, 512, 32
        $region28: #{tpu_custom_call.1} parent=19 // pred_fallthru
          _
      $region20: #{tpu_custom_call.1} parent=5 // pred_fallthru
        _
      %p178 = scmp.le.s32.totalorder 1, %s16
      %p179 = scmp.lt.s32.totalorder %s16, 5
      %p180 = pnand %p178, %p179
      %p181 = pneg %p180
      // Predicated region
      $region29: #{tpu_custom_call.1} parent=5 // pred_check
        _
      $region30: #{tpu_custom_call.1} parent=5 // pred_check_branch
        %183 = sbr.rel (%p180) target = $region32
      $region31: #{tpu_custom_call.1} parent=5 // pred_region
        %s184 = ssub.s32 %s16, 1
        %s185 = sand.u32 %s55, 1
        %s186 = scalar_lea.sflag [#allocation3], %s185
        %s187 = sand.u32 %s55, 1
        %s188 = smul.addr %s187, 1024
        %s189 = scalar_lea.vmem [#allocation2], %s188
        // Predicated region
        $region33: #{tpu_custom_call.1} parent=31 // pred_check
          %p190 = pneg %p68
        $region34: #{tpu_custom_call.1} parent=31 // pred_check_branch
          %192 = sbr.rel (%p190) target = $region36
        $region35: #{tpu_custom_call.1} parent=31 // pred_region
          %193 = dma.done %s186, 16384
        $region36: #{tpu_custom_call.1} parent=31 // pred_fallthru
          _
        // Predicated region
        $region37: #{tpu_custom_call.1} parent=31 // pred_check
          %p194 = pneg %p89
        $region38: #{tpu_custom_call.1} parent=31 // pred_check_branch
          %196 = sbr.rel (%p194) target = $region40
        $region39: #{tpu_custom_call.1} parent=31 // pred_region
          %197 = dma.done [#allocation6], 8192
        $region40: #{tpu_custom_call.1} parent=31 // pred_fallthru
          _
        %s198 = smul.u32 32, %s21
        %p199 = scmp.lt.s32.totalorder %s198, 127
        %s200 = scalar_select %p199, %s198, 127
        %s201 = smul.addr %s200, 8
        %s202 = scalar_lea.vmem %s0, %s201
        %p203 = pneg %p42
        %p204 = pneg %p39
        %s205 = sand.u32 %s55, 1
        %s206 = scalar_lea.sflag [#allocation3], %s205
        %s207 = sand.u32 %s55, 1
        %s208 = smul.addr %s207, 1024
        %s209 = scalar_lea.vmem [#allocation2], %s208
        %p210 = pneg %p68
        %p211 = pneg %p65
        %p212 = pneg %p89
        %p213 = pneg %p86
        %p214 = pneg %p115
        %p215 = pneg %p112
        %s216 = sand.u32 %s102, 1
        %s217 = scalar_lea.sflag [#allocation4], %s216
        %s218 = sand.u32 %s102, 1
        %s219 = smul.addr %s218, 128
        %s220 = scalar_lea.vmem [#allocation7], %s219
        %s221 = smul.u32 32, %s21
        %p222 = scmp.lt.s32.totalorder %s221, 127
        %s223 = scalar_select %p222, %s221, 127
        %s224 = smul.addr %s223, 8
        %s225 = scalar_lea.vmem %s0, %s224
        %s226 = smul.u32 32, %s21
        %s227 = smul.u32 32, %s21
        %s228 = smul.u32 32, %s21
        %v230 = vld [vmem:[%s189] sm:$0xff]
        %v231 = vld [vmem:[%s189 + $0x8] sm:$0xff]
        %v232 = vld [vmem:[%s189 + $0x10] sm:$0xff]
        %v233 = vld [vmem:[%s189 + $0x18] sm:$0xff]
        %v234 = vld [vmem:[%s189 + $0x20] sm:$0xff]
        %v235 = vld [vmem:[%s189 + $0x28] sm:$0xff]
        %v236 = vld [vmem:[%s189 + $0x30] sm:$0xff]
        %v237 = vld [vmem:[%s189 + $0x38] sm:$0xff]
        %v238 = vld [vmem:[%s189 + $0x40] sm:$0xff]
        %v239 = vld [vmem:[%s189 + $0x48] sm:$0xff]
        %v240 = vld [vmem:[%s189 + $0x50] sm:$0xff]
        %v241 = vld [vmem:[%s189 + $0x58] sm:$0xff]
        %v242 = vld [vmem:[%s189 + $0x60] sm:$0xff]
        %v243 = vld [vmem:[%s189 + $0x68] sm:$0xff]
        %v244 = vld [vmem:[%s189 + $0x70] sm:$0xff]
        %v245 = vld [vmem:[%s189 + $0x78] sm:$0xff]
        %v246 = vld [vmem:[%s189 + $0x80] sm:$0xff]
        %v247 = vld [vmem:[%s189 + $0x88] sm:$0xff]
        %v248 = vld [vmem:[%s189 + $0x90] sm:$0xff]
        %v249 = vld [vmem:[%s189 + $0x98] sm:$0xff]
        %v250 = vld [vmem:[%s189 + $0xa0] sm:$0xff]
        %v251 = vld [vmem:[%s189 + $0xa8] sm:$0xff]
        %v252 = vld [vmem:[%s189 + $0xb0] sm:$0xff]
        %v253 = vld [vmem:[%s189 + $0xb8] sm:$0xff]
        %v254 = vld [vmem:[%s189 + $0xc0] sm:$0xff]
        %v255 = vld [vmem:[%s189 + $0xc8] sm:$0xff]
        %v256 = vld [vmem:[%s189 + $0xd0] sm:$0xff]
        %v257 = vld [vmem:[%s189 + $0xd8] sm:$0xff]
        %v258 = vld [vmem:[%s189 + $0xe0] sm:$0xff]
        %v259 = vld [vmem:[%s189 + $0xe8] sm:$0xff]
        %v260 = vld [vmem:[%s189 + $0xf0] sm:$0xff]
        %v261 = vld [vmem:[%s189 + $0xf8] sm:$0xff]
        %v262 = vld [vmem:[%s189 + $0x100] sm:$0xff]
        %v263 = vld [vmem:[%s189 + $0x108] sm:$0xff]
        %v264 = vld [vmem:[%s189 + $0x110] sm:$0xff]
        %v265 = vld [vmem:[%s189 + $0x118] sm:$0xff]
        %v266 = vld [vmem:[%s189 + $0x120] sm:$0xff]
        %v267 = vld [vmem:[%s189 + $0x128] sm:$0xff]
        %v268 = vld [vmem:[%s189 + $0x130] sm:$0xff]
        %v269 = vld [vmem:[%s189 + $0x138] sm:$0xff]
        %v270 = vld [vmem:[%s189 + $0x140] sm:$0xff]
        %v271 = vld [vmem:[%s189 + $0x148] sm:$0xff]
        %v272 = vld [vmem:[%s189 + $0x150] sm:$0xff]
        %v273 = vld [vmem:[%s189 + $0x158] sm:$0xff]
        %v274 = vld [vmem:[%s189 + $0x160] sm:$0xff]
        %v275 = vld [vmem:[%s189 + $0x168] sm:$0xff]
        %v276 = vld [vmem:[%s189 + $0x170] sm:$0xff]
        %v277 = vld [vmem:[%s189 + $0x178] sm:$0xff]
        %v278 = vld [vmem:[%s189 + $0x180] sm:$0xff]
        %v279 = vld [vmem:[%s189 + $0x188] sm:$0xff]
        %v280 = vld [vmem:[%s189 + $0x190] sm:$0xff]
        %v281 = vld [vmem:[%s189 + $0x198] sm:$0xff]
        %v282 = vld [vmem:[%s189 + $0x1a0] sm:$0xff]
        %v283 = vld [vmem:[%s189 + $0x1a8] sm:$0xff]
        %v284 = vld [vmem:[%s189 + $0x1b0] sm:$0xff]
        %v285 = vld [vmem:[%s189 + $0x1b8] sm:$0xff]
        %v286 = vld [vmem:[%s189 + $0x1c0] sm:$0xff]
        %v287 = vld [vmem:[%s189 + $0x1c8] sm:$0xff]
        %v288 = vld [vmem:[%s189 + $0x1d0] sm:$0xff]
        %v289 = vld [vmem:[%s189 + $0x1d8] sm:$0xff]
        %v290 = vld [vmem:[%s189 + $0x1e0] sm:$0xff]
        %v291 = vld [vmem:[%s189 + $0x1e8] sm:$0xff]
        %v292 = vld [vmem:[%s189 + $0x1f0] sm:$0xff]
        %v293 = vld [vmem:[%s189 + $0x1f8] sm:$0xff]
        %v294 = vld [vmem:[%s189 + $0x200] sm:$0xff]
        %v295 = vld [vmem:[%s189 + $0x208] sm:$0xff]
        %v296 = vld [vmem:[%s189 + $0x210] sm:$0xff]
        %v297 = vld [vmem:[%s189 + $0x218] sm:$0xff]
        %v298 = vld [vmem:[%s189 + $0x220] sm:$0xff]
        %v299 = vld [vmem:[%s189 + $0x228] sm:$0xff]
        %v300 = vld [vmem:[%s189 + $0x230] sm:$0xff]
        %v301 = vld [vmem:[%s189 + $0x238] sm:$0xff]
        %v302 = vld [vmem:[%s189 + $0x240] sm:$0xff]
        %v303 = vld [vmem:[%s189 + $0x248] sm:$0xff]
        %v304 = vld [vmem:[%s189 + $0x250] sm:$0xff]
        %v305 = vld [vmem:[%s189 + $0x258] sm:$0xff]
        %v306 = vld [vmem:[%s189 + $0x260] sm:$0xff]
        %v307 = vld [vmem:[%s189 + $0x268] sm:$0xff]
        %v308 = vld [vmem:[%s189 + $0x270] sm:$0xff]
        %v309 = vld [vmem:[%s189 + $0x278] sm:$0xff]
        %v310 = vld [vmem:[%s189 + $0x280] sm:$0xff]
        %v311 = vld [vmem:[%s189 + $0x288] sm:$0xff]
        %v312 = vld [vmem:[%s189 + $0x290] sm:$0xff]
        %v313 = vld [vmem:[%s189 + $0x298] sm:$0xff]
        %v314 = vld [vmem:[%s189 + $0x2a0] sm:$0xff]
        %v315 = vld [vmem:[%s189 + $0x2a8] sm:$0xff]
        %v316 = vld [vmem:[%s189 + $0x2b0] sm:$0xff]
        %v317 = vld [vmem:[%s189 + $0x2b8] sm:$0xff]
        %v318 = vld [vmem:[%s189 + $0x2c0] sm:$0xff]
        %v319 = vld [vmem:[%s189 + $0x2c8] sm:$0xff]
        %v320 = vld [vmem:[%s189 + $0x2d0] sm:$0xff]
        %v321 = vld [vmem:[%s189 + $0x2d8] sm:$0xff]
        %v322 = vld [vmem:[%s189 + $0x2e0] sm:$0xff]
        %v323 = vld [vmem:[%s189 + $0x2e8] sm:$0xff]
        %v324 = vld [vmem:[%s189 + $0x2f0] sm:$0xff]
        %v325 = vld [vmem:[%s189 + $0x2f8] sm:$0xff]
        %v326 = vld [vmem:[%s189 + $0x300] sm:$0xff]
        %v327 = vld [vmem:[%s189 + $0x308] sm:$0xff]
        %v328 = vld [vmem:[%s189 + $0x310] sm:$0xff]
        %v329 = vld [vmem:[%s189 + $0x318] sm:$0xff]
        %v330 = vld [vmem:[%s189 + $0x320] sm:$0xff]
        %v331 = vld [vmem:[%s189 + $0x328] sm:$0xff]
        %v332 = vld [vmem:[%s189 + $0x330] sm:$0xff]
        %v333 = vld [vmem:[%s189 + $0x338] sm:$0xff]
        %v334 = vld [vmem:[%s189 + $0x340] sm:$0xff]
        %v335 = vld [vmem:[%s189 + $0x348] sm:$0xff]
        %v336 = vld [vmem:[%s189 + $0x350] sm:$0xff]
        %v337 = vld [vmem:[%s189 + $0x358] sm:$0xff]
        %v338 = vld [vmem:[%s189 + $0x360] sm:$0xff]
        %v339 = vld [vmem:[%s189 + $0x368] sm:$0xff]
        %v340 = vld [vmem:[%s189 + $0x370] sm:$0xff]
        %v341 = vld [vmem:[%s189 + $0x378] sm:$0xff]
        %v342 = vld [vmem:[%s189 + $0x380] sm:$0xff]
        %v343 = vld [vmem:[%s189 + $0x388] sm:$0xff]
        %v344 = vld [vmem:[%s189 + $0x390] sm:$0xff]
        %v345 = vld [vmem:[%s189 + $0x398] sm:$0xff]
        %v346 = vld [vmem:[%s189 + $0x3a0] sm:$0xff]
        %v347 = vld [vmem:[%s189 + $0x3a8] sm:$0xff]
        %v348 = vld [vmem:[%s189 + $0x3b0] sm:$0xff]
        %v349 = vld [vmem:[%s189 + $0x3b8] sm:$0xff]
        %v350 = vld [vmem:[%s189 + $0x3c0] sm:$0xff]
        %v351 = vld [vmem:[%s189 + $0x3c8] sm:$0xff]
        %v352 = vld [vmem:[%s189 + $0x3d0] sm:$0xff]
        %v353 = vld [vmem:[%s189 + $0x3d8] sm:$0xff]
        %v354 = vld [vmem:[%s189 + $0x3e0] sm:$0xff]
        %v355 = vld [vmem:[%s189 + $0x3e8] sm:$0xff]
        %v356 = vld [vmem:[%s189 + $0x3f0] sm:$0xff]
        %v357 = vld [vmem:[%s189 + $0x3f8] sm:$0xff]
        %v358 = vld [vmem:[#allocation5] sm:$0xf]
        %v359 = vld [vmem:[#allocation5 + $0x4] sm:$0xf]
        %v360 = vld [vmem:[#allocation5 + $0x8] sm:$0xf]
        %v361 = vld [vmem:[#allocation5 + $0xc] sm:$0xf]
        %v362 = vld [vmem:[#allocation5 + $0x10] sm:$0xf]
        %v363 = vld [vmem:[#allocation5 + $0x14] sm:$0xf]
        %v364 = vld [vmem:[#allocation5 + $0x18] sm:$0xf]
        %v365 = vld [vmem:[#allocation5 + $0x1c] sm:$0xf]
        %v366 = vld [vmem:[#allocation5 + $0x20] sm:$0xf]
        %v367 = vld [vmem:[#allocation5 + $0x24] sm:$0xf]
        %v368 = vld [vmem:[#allocation5 + $0x28] sm:$0xf]
        %v369 = vld [vmem:[#allocation5 + $0x2c] sm:$0xf]
        %v370 = vld [vmem:[#allocation5 + $0x30] sm:$0xf]
        %v371 = vld [vmem:[#allocation5 + $0x34] sm:$0xf]
        %v372 = vld [vmem:[#allocation5 + $0x38] sm:$0xf]
        %v373 = vld [vmem:[#allocation5 + $0x3c] sm:$0xf]
        %v374 = vld [vmem:[#allocation5 + $0x40] sm:$0xf]
        %v375 = vld [vmem:[#allocation5 + $0x44] sm:$0xf]
        %v376 = vld [vmem:[#allocation5 + $0x48] sm:$0xf]
        %v377 = vld [vmem:[#allocation5 + $0x4c] sm:$0xf]
        %v378 = vld [vmem:[#allocation5 + $0x50] sm:$0xf]
        %v379 = vld [vmem:[#allocation5 + $0x54] sm:$0xf]
        %v380 = vld [vmem:[#allocation5 + $0x58] sm:$0xf]
        %v381 = vld [vmem:[#allocation5 + $0x5c] sm:$0xf]
        %v382 = vld [vmem:[#allocation5 + $0x60] sm:$0xf]
        %v383 = vld [vmem:[#allocation5 + $0x64] sm:$0xf]
        %v384 = vld [vmem:[#allocation5 + $0x68] sm:$0xf]
        %v385 = vld [vmem:[#allocation5 + $0x6c] sm:$0xf]
        %v386 = vld [vmem:[#allocation5 + $0x70] sm:$0xf]
        %v387 = vld [vmem:[#allocation5 + $0x74] sm:$0xf]
        %v388 = vld [vmem:[#allocation5 + $0x78] sm:$0xf]
        %v389 = vld [vmem:[#allocation5 + $0x7c] sm:$0xf]
        %v390 = vld [vmem:[#allocation5 + $0x80] sm:$0xf]
        %v391 = vld [vmem:[#allocation5 + $0x84] sm:$0xf]
        %v392 = vld [vmem:[#allocation5 + $0x88] sm:$0xf]
        %v393 = vld [vmem:[#allocation5 + $0x8c] sm:$0xf]
        %v394 = vld [vmem:[#allocation5 + $0x90] sm:$0xf]
        %v395 = vld [vmem:[#allocation5 + $0x94] sm:$0xf]
        %v396 = vld [vmem:[#allocation5 + $0x98] sm:$0xf]
        %v397 = vld [vmem:[#allocation5 + $0x9c] sm:$0xf]
        %v398 = vld [vmem:[#allocation5 + $0xa0] sm:$0xf]
        %v399 = vld [vmem:[#allocation5 + $0xa4] sm:$0xf]
        %v400 = vld [vmem:[#allocation5 + $0xa8] sm:$0xf]
        %v401 = vld [vmem:[#allocation5 + $0xac] sm:$0xf]
        %v402 = vld [vmem:[#allocation5 + $0xb0] sm:$0xf]
        %v403 = vld [vmem:[#allocation5 + $0xb4] sm:$0xf]
        %v404 = vld [vmem:[#allocation5 + $0xb8] sm:$0xf]
        %v405 = vld [vmem:[#allocation5 + $0xbc] sm:$0xf]
        %v406 = vld [vmem:[#allocation5 + $0xc0] sm:$0xf]
        %v407 = vld [vmem:[#allocation5 + $0xc4] sm:$0xf]
        %v408 = vld [vmem:[#allocation5 + $0xc8] sm:$0xf]
        %v409 = vld [vmem:[#allocation5 + $0xcc] sm:$0xf]
        %v410 = vld [vmem:[#allocation5 + $0xd0] sm:$0xf]
        %v411 = vld [vmem:[#allocation5 + $0xd4] sm:$0xf]
        %v412 = vld [vmem:[#allocation5 + $0xd8] sm:$0xf]
        %v413 = vld [vmem:[#allocation5 + $0xdc] sm:$0xf]
        %v414 = vld [vmem:[#allocation5 + $0xe0] sm:$0xf]
        %v415 = vld [vmem:[#allocation5 + $0xe4] sm:$0xf]
        %v416 = vld [vmem:[#allocation5 + $0xe8] sm:$0xf]
        %v417 = vld [vmem:[#allocation5 + $0xec] sm:$0xf]
        %v418 = vld [vmem:[#allocation5 + $0xf0] sm:$0xf]
        %v419 = vld [vmem:[#allocation5 + $0xf4] sm:$0xf]
        %v420 = vld [vmem:[#allocation5 + $0xf8] sm:$0xf]
        %v421 = vld [vmem:[#allocation5 + $0xfc] sm:$0xf]
        %v422 = vld [vmem:[#allocation5 + $0x100] sm:$0xf]
        %v423 = vld [vmem:[#allocation5 + $0x104] sm:$0xf]
        %v424 = vld [vmem:[#allocation5 + $0x108] sm:$0xf]
        %v425 = vld [vmem:[#allocation5 + $0x10c] sm:$0xf]
        %v426 = vld [vmem:[#allocation5 + $0x110] sm:$0xf]
        %v427 = vld [vmem:[#allocation5 + $0x114] sm:$0xf]
        %v428 = vld [vmem:[#allocation5 + $0x118] sm:$0xf]
        %v429 = vld [vmem:[#allocation5 + $0x11c] sm:$0xf]
        %v430 = vld [vmem:[#allocation5 + $0x120] sm:$0xf]
        %v431 = vld [vmem:[#allocation5 + $0x124] sm:$0xf]
        %v432 = vld [vmem:[#allocation5 + $0x128] sm:$0xf]
        %v433 = vld [vmem:[#allocation5 + $0x12c] sm:$0xf]
        %v434 = vld [vmem:[#allocation5 + $0x130] sm:$0xf]
        %v435 = vld [vmem:[#allocation5 + $0x134] sm:$0xf]
        %v436 = vld [vmem:[#allocation5 + $0x138] sm:$0xf]
        %v437 = vld [vmem:[#allocation5 + $0x13c] sm:$0xf]
        %v438 = vld [vmem:[#allocation5 + $0x140] sm:$0xf]
        %v439 = vld [vmem:[#allocation5 + $0x144] sm:$0xf]
        %v440 = vld [vmem:[#allocation5 + $0x148] sm:$0xf]
        %v441 = vld [vmem:[#allocation5 + $0x14c] sm:$0xf]
        %v442 = vld [vmem:[#allocation5 + $0x150] sm:$0xf]
        %v443 = vld [vmem:[#allocation5 + $0x154] sm:$0xf]
        %v444 = vld [vmem:[#allocation5 + $0x158] sm:$0xf]
        %v445 = vld [vmem:[#allocation5 + $0x15c] sm:$0xf]
        %v446 = vld [vmem:[#allocation5 + $0x160] sm:$0xf]
        %v447 = vld [vmem:[#allocation5 + $0x164] sm:$0xf]
        %v448 = vld [vmem:[#allocation5 + $0x168] sm:$0xf]
        %v449 = vld [vmem:[#allocation5 + $0x16c] sm:$0xf]
        %v450 = vld [vmem:[#allocation5 + $0x170] sm:$0xf]
        %v451 = vld [vmem:[#allocation5 + $0x174] sm:$0xf]
        %v452 = vld [vmem:[#allocation5 + $0x178] sm:$0xf]
        %v453 = vld [vmem:[#allocation5 + $0x17c] sm:$0xf]
        %v454 = vld [vmem:[#allocation5 + $0x180] sm:$0xf]
        %v455 = vld [vmem:[#allocation5 + $0x184] sm:$0xf]
        %v456 = vld [vmem:[#allocation5 + $0x188] sm:$0xf]
        %v457 = vld [vmem:[#allocation5 + $0x18c] sm:$0xf]
        %v458 = vld [vmem:[#allocation5 + $0x190] sm:$0xf]
        %v459 = vld [vmem:[#allocation5 + $0x194] sm:$0xf]
        %v460 = vld [vmem:[#allocation5 + $0x198] sm:$0xf]
        %v461 = vld [vmem:[#allocation5 + $0x19c] sm:$0xf]
        %v462 = vld [vmem:[#allocation5 + $0x1a0] sm:$0xf]
        %v463 = vld [vmem:[#allocation5 + $0x1a4] sm:$0xf]
        %v464 = vld [vmem:[#allocation5 + $0x1a8] sm:$0xf]
        %v465 = vld [vmem:[#allocation5 + $0x1ac] sm:$0xf]
        %v466 = vld [vmem:[#allocation5 + $0x1b0] sm:$0xf]
        %v467 = vld [vmem:[#allocation5 + $0x1b4] sm:$0xf]
        %v468 = vld [vmem:[#allocation5 + $0x1b8] sm:$0xf]
        %v469 = vld [vmem:[#allocation5 + $0x1bc] sm:$0xf]
        %v470 = vld [vmem:[#allocation5 + $0x1c0] sm:$0xf]
        %v471 = vld [vmem:[#allocation5 + $0x1c4] sm:$0xf]
        %v472 = vld [vmem:[#allocation5 + $0x1c8] sm:$0xf]
        %v473 = vld [vmem:[#allocation5 + $0x1cc] sm:$0xf]
        %v474 = vld [vmem:[#allocation5 + $0x1d0] sm:$0xf]
        %v475 = vld [vmem:[#allocation5 + $0x1d4] sm:$0xf]
        %v476 = vld [vmem:[#allocation5 + $0x1d8] sm:$0xf]
        %v477 = vld [vmem:[#allocation5 + $0x1dc] sm:$0xf]
        %v478 = vld [vmem:[#allocation5 + $0x1e0] sm:$0xf]
        %v479 = vld [vmem:[#allocation5 + $0x1e4] sm:$0xf]
        %v480 = vld [vmem:[#allocation5 + $0x1e8] sm:$0xf]
        %v481 = vld [vmem:[#allocation5 + $0x1ec] sm:$0xf]
        %v482 = vld [vmem:[#allocation5 + $0x1f0] sm:$0xf]
        %v483 = vld [vmem:[#allocation5 + $0x1f4] sm:$0xf]
        %v484 = vld [vmem:[#allocation5 + $0x1f8] sm:$0xf]
        %v485 = vld [vmem:[#allocation5 + $0x1fc] sm:$0xf]
        %v614 = vunpack.c.l.b16 %v230
        %v615 = vunpack.c.h.b16 %v230
        %v616 = vunpack.c.l.b16 %v231
        %v617 = vunpack.c.h.b16 %v231
        %v618 = vunpack.c.l.b16 %v232
        %v619 = vunpack.c.h.b16 %v232
        %v620 = vunpack.c.l.b16 %v233
        %v621 = vunpack.c.h.b16 %v233
        %v622 = vunpack.c.l.b16 %v234
        %v623 = vunpack.c.h.b16 %v234
        %v624 = vunpack.c.l.b16 %v235
        %v625 = vunpack.c.h.b16 %v235
        %v626 = vunpack.c.l.b16 %v236
        %v627 = vunpack.c.h.b16 %v236
        %v628 = vunpack.c.l.b16 %v237
        %v629 = vunpack.c.h.b16 %v237
        %v630 = vunpack.c.l.b16 %v238
        %v631 = vunpack.c.h.b16 %v238
        %v632 = vunpack.c.l.b16 %v239
        %v633 = vunpack.c.h.b16 %v239
        %v634 = vunpack.c.l.b16 %v240
        %v635 = vunpack.c.h.b16 %v240
        %v636 = vunpack.c.l.b16 %v241
        %v637 = vunpack.c.h.b16 %v241
        %v638 = vunpack.c.l.b16 %v242
        %v639 = vunpack.c.h.b16 %v242
        %v640 = vunpack.c.l.b16 %v243
        %v641 = vunpack.c.h.b16 %v243
        %v642 = vunpack.c.l.b16 %v244
        %v643 = vunpack.c.h.b16 %v244
        %v644 = vunpack.c.l.b16 %v245
        %v645 = vunpack.c.h.b16 %v245
        %v646 = vunpack.c.l.b16 %v246
        %v647 = vunpack.c.h.b16 %v246
        %v648 = vunpack.c.l.b16 %v247
        %v649 = vunpack.c.h.b16 %v247
        %v650 = vunpack.c.l.b16 %v248
        %v651 = vunpack.c.h.b16 %v248
        %v652 = vunpack.c.l.b16 %v249
        %v653 = vunpack.c.h.b16 %v249
        %v654 = vunpack.c.l.b16 %v250
        %v655 = vunpack.c.h.b16 %v250
        %v656 = vunpack.c.l.b16 %v251
        %v657 = vunpack.c.h.b16 %v251
        %v658 = vunpack.c.l.b16 %v252
        %v659 = vunpack.c.h.b16 %v252
        %v660 = vunpack.c.l.b16 %v253
        %v661 = vunpack.c.h.b16 %v253
        %v662 = vunpack.c.l.b16 %v254
        %v663 = vunpack.c.h.b16 %v254
        %v664 = vunpack.c.l.b16 %v255
        %v665 = vunpack.c.h.b16 %v255
        %v666 = vunpack.c.l.b16 %v256
        %v667 = vunpack.c.h.b16 %v256
        %v668 = vunpack.c.l.b16 %v257
        %v669 = vunpack.c.h.b16 %v257
        %v670 = vunpack.c.l.b16 %v258
        %v671 = vunpack.c.h.b16 %v258
        %v672 = vunpack.c.l.b16 %v259
        %v673 = vunpack.c.h.b16 %v259
        %v674 = vunpack.c.l.b16 %v260
        %v675 = vunpack.c.h.b16 %v260
        %v676 = vunpack.c.l.b16 %v261
        %v677 = vunpack.c.h.b16 %v261
        %v678 = vunpack.c.l.b16 %v262
        %v679 = vunpack.c.h.b16 %v262
        %v680 = vunpack.c.l.b16 %v263
        %v681 = vunpack.c.h.b16 %v263
        %v682 = vunpack.c.l.b16 %v264
        %v683 = vunpack.c.h.b16 %v264
        %v684 = vunpack.c.l.b16 %v265
        %v685 = vunpack.c.h.b16 %v265
        %v686 = vunpack.c.l.b16 %v266
        %v687 = vunpack.c.h.b16 %v266
        %v688 = vunpack.c.l.b16 %v267
        %v689 = vunpack.c.h.b16 %v267
        %v690 = vunpack.c.l.b16 %v268
        %v691 = vunpack.c.h.b16 %v268
        %v692 = vunpack.c.l.b16 %v269
        %v693 = vunpack.c.h.b16 %v269
        %v694 = vunpack.c.l.b16 %v270
        %v695 = vunpack.c.h.b16 %v270
        %v696 = vunpack.c.l.b16 %v271
        %v697 = vunpack.c.h.b16 %v271
        %v698 = vunpack.c.l.b16 %v272
        %v699 = vunpack.c.h.b16 %v272
        %v700 = vunpack.c.l.b16 %v273
        %v701 = vunpack.c.h.b16 %v273
        %v702 = vunpack.c.l.b16 %v274
        %v703 = vunpack.c.h.b16 %v274
        %v704 = vunpack.c.l.b16 %v275
        %v705 = vunpack.c.h.b16 %v275
        %v706 = vunpack.c.l.b16 %v276
        %v707 = vunpack.c.h.b16 %v276
        %v708 = vunpack.c.l.b16 %v277
        %v709 = vunpack.c.h.b16 %v277
        %v710 = vunpack.c.l.b16 %v278
        %v711 = vunpack.c.h.b16 %v278
        %v712 = vunpack.c.l.b16 %v279
        %v713 = vunpack.c.h.b16 %v279
        %v714 = vunpack.c.l.b16 %v280
        %v715 = vunpack.c.h.b16 %v280
        %v716 = vunpack.c.l.b16 %v281
        %v717 = vunpack.c.h.b16 %v281
        %v718 = vunpack.c.l.b16 %v282
        %v719 = vunpack.c.h.b16 %v282
        %v720 = vunpack.c.l.b16 %v283
        %v721 = vunpack.c.h.b16 %v283
        %v722 = vunpack.c.l.b16 %v284
        %v723 = vunpack.c.h.b16 %v284
        %v724 = vunpack.c.l.b16 %v285
        %v725 = vunpack.c.h.b16 %v285
        %v726 = vunpack.c.l.b16 %v286
        %v727 = vunpack.c.h.b16 %v286
        %v728 = vunpack.c.l.b16 %v287
        %v729 = vunpack.c.h.b16 %v287
        %v730 = vunpack.c.l.b16 %v288
        %v731 = vunpack.c.h.b16 %v288
        %v732 = vunpack.c.l.b16 %v289
        %v733 = vunpack.c.h.b16 %v289
        %v734 = vunpack.c.l.b16 %v290
        %v735 = vunpack.c.h.b16 %v290
        %v736 = vunpack.c.l.b16 %v291
        %v737 = vunpack.c.h.b16 %v291
        %v738 = vunpack.c.l.b16 %v292
        %v739 = vunpack.c.h.b16 %v292
        %v740 = vunpack.c.l.b16 %v293
        %v741 = vunpack.c.h.b16 %v293
        %v742 = vunpack.c.l.b16 %v294
        %v743 = vunpack.c.h.b16 %v294
        %v744 = vunpack.c.l.b16 %v295
        %v745 = vunpack.c.h.b16 %v295
        %v746 = vunpack.c.l.b16 %v296
        %v747 = vunpack.c.h.b16 %v296
        %v748 = vunpack.c.l.b16 %v297
        %v749 = vunpack.c.h.b16 %v297
        %v750 = vunpack.c.l.b16 %v298
        %v751 = vunpack.c.h.b16 %v298
        %v752 = vunpack.c.l.b16 %v299
        %v753 = vunpack.c.h.b16 %v299
        %v754 = vunpack.c.l.b16 %v300
        %v755 = vunpack.c.h.b16 %v300
        %v756 = vunpack.c.l.b16 %v301
        %v757 = vunpack.c.h.b16 %v301
        %v758 = vunpack.c.l.b16 %v302
        %v759 = vunpack.c.h.b16 %v302
        %v760 = vunpack.c.l.b16 %v303
        %v761 = vunpack.c.h.b16 %v303
        %v762 = vunpack.c.l.b16 %v304
        %v763 = vunpack.c.h.b16 %v304
        %v764 = vunpack.c.l.b16 %v305
        %v765 = vunpack.c.h.b16 %v305
        %v766 = vunpack.c.l.b16 %v306
        %v767 = vunpack.c.h.b16 %v306
        %v768 = vunpack.c.l.b16 %v307
        %v769 = vunpack.c.h.b16 %v307
        %v770 = vunpack.c.l.b16 %v308
        %v771 = vunpack.c.h.b16 %v308
        %v772 = vunpack.c.l.b16 %v309
        %v773 = vunpack.c.h.b16 %v309
        %v774 = vunpack.c.l.b16 %v310
        %v775 = vunpack.c.h.b16 %v310
        %v776 = vunpack.c.l.b16 %v311
        %v777 = vunpack.c.h.b16 %v311
        %v778 = vunpack.c.l.b16 %v312
        %v779 = vunpack.c.h.b16 %v312
        %v780 = vunpack.c.l.b16 %v313
        %v781 = vunpack.c.h.b16 %v313
        %v782 = vunpack.c.l.b16 %v314
        %v783 = vunpack.c.h.b16 %v314
        %v784 = vunpack.c.l.b16 %v315
        %v785 = vunpack.c.h.b16 %v315
        %v786 = vunpack.c.l.b16 %v316
        %v787 = vunpack.c.h.b16 %v316
        %v788 = vunpack.c.l.b16 %v317
        %v789 = vunpack.c.h.b16 %v317
        %v790 = vunpack.c.l.b16 %v318
        %v791 = vunpack.c.h.b16 %v318
        %v792 = vunpack.c.l.b16 %v319
        %v793 = vunpack.c.h.b16 %v319
        %v794 = vunpack.c.l.b16 %v320
        %v795 = vunpack.c.h.b16 %v320
        %v796 = vunpack.c.l.b16 %v321
        %v797 = vunpack.c.h.b16 %v321
        %v798 = vunpack.c.l.b16 %v322
        %v799 = vunpack.c.h.b16 %v322
        %v800 = vunpack.c.l.b16 %v323
        %v801 = vunpack.c.h.b16 %v323
        %v802 = vunpack.c.l.b16 %v324
        %v803 = vunpack.c.h.b16 %v324
        %v804 = vunpack.c.l.b16 %v325
        %v805 = vunpack.c.h.b16 %v325
        %v806 = vunpack.c.l.b16 %v326
        %v807 = vunpack.c.h.b16 %v326
        %v808 = vunpack.c.l.b16 %v327
        %v809 = vunpack.c.h.b16 %v327
        %v810 = vunpack.c.l.b16 %v328
        %v811 = vunpack.c.h.b16 %v328
        %v812 = vunpack.c.l.b16 %v329
        %v813 = vunpack.c.h.b16 %v329
        %v814 = vunpack.c.l.b16 %v330
        %v815 = vunpack.c.h.b16 %v330
        %v816 = vunpack.c.l.b16 %v331
        %v817 = vunpack.c.h.b16 %v331
        %v818 = vunpack.c.l.b16 %v332
        %v819 = vunpack.c.h.b16 %v332
        %v820 = vunpack.c.l.b16 %v333
        %v821 = vunpack.c.h.b16 %v333
        %v822 = vunpack.c.l.b16 %v334
        %v823 = vunpack.c.h.b16 %v334
        %v824 = vunpack.c.l.b16 %v335
        %v825 = vunpack.c.h.b16 %v335
        %v826 = vunpack.c.l.b16 %v336
        %v827 = vunpack.c.h.b16 %v336
        %v828 = vunpack.c.l.b16 %v337
        %v829 = vunpack.c.h.b16 %v337
        %v830 = vunpack.c.l.b16 %v338
        %v831 = vunpack.c.h.b16 %v338
        %v832 = vunpack.c.l.b16 %v339
        %v833 = vunpack.c.h.b16 %v339
        %v834 = vunpack.c.l.b16 %v340
        %v835 = vunpack.c.h.b16 %v340
        %v836 = vunpack.c.l.b16 %v341
        %v837 = vunpack.c.h.b16 %v341
        %v838 = vunpack.c.l.b16 %v342
        %v839 = vunpack.c.h.b16 %v342
        %v840 = vunpack.c.l.b16 %v343
        %v841 = vunpack.c.h.b16 %v343
        %v842 = vunpack.c.l.b16 %v344
        %v843 = vunpack.c.h.b16 %v344
        %v844 = vunpack.c.l.b16 %v345
        %v845 = vunpack.c.h.b16 %v345
        %v846 = vunpack.c.l.b16 %v346
        %v847 = vunpack.c.h.b16 %v346
        %v848 = vunpack.c.l.b16 %v347
        %v849 = vunpack.c.h.b16 %v347
        %v850 = vunpack.c.l.b16 %v348
        %v851 = vunpack.c.h.b16 %v348
        %v852 = vunpack.c.l.b16 %v349
        %v853 = vunpack.c.h.b16 %v349
        %v854 = vunpack.c.l.b16 %v350
        %v855 = vunpack.c.h.b16 %v350
        %v856 = vunpack.c.l.b16 %v351
        %v857 = vunpack.c.h.b16 %v351
        %v858 = vunpack.c.l.b16 %v352
        %v859 = vunpack.c.h.b16 %v352
        %v860 = vunpack.c.l.b16 %v353
        %v861 = vunpack.c.h.b16 %v353
        %v862 = vunpack.c.l.b16 %v354
        %v863 = vunpack.c.h.b16 %v354
        %v864 = vunpack.c.l.b16 %v355
        %v865 = vunpack.c.h.b16 %v355
        %v866 = vunpack.c.l.b16 %v356
        %v867 = vunpack.c.h.b16 %v356
        %v868 = vunpack.c.l.b16 %v357
        %v869 = vunpack.c.h.b16 %v357
        %v870 = vpack.c.b16 %v622, %v614
        %v871 = vpack.c.b16 %v623, %v615
        %v872 = vpack.c.b16 %v624, %v616
        %v873 = vpack.c.b16 %v625, %v617
        %v874 = vpack.c.b16 %v626, %v618
        %v875 = vpack.c.b16 %v627, %v619
        %v876 = vpack.c.b16 %v628, %v620
        %v877 = vpack.c.b16 %v629, %v621
        %v878 = vpack.c.b16 %v638, %v630
        %v879 = vpack.c.b16 %v639, %v631
        %v880 = vpack.c.b16 %v640, %v632
        %v881 = vpack.c.b16 %v641, %v633
        %v882 = vpack.c.b16 %v642, %v634
        %v883 = vpack.c.b16 %v643, %v635
        %v884 = vpack.c.b16 %v644, %v636
        %v885 = vpack.c.b16 %v645, %v637
        %v886 = vpack.c.b16 %v654, %v646
        %v887 = vpack.c.b16 %v655, %v647
        %v888 = vpack.c.b16 %v656, %v648
        %v889 = vpack.c.b16 %v657, %v649
        %v890 = vpack.c.b16 %v658, %v650
        %v891 = vpack.c.b16 %v659, %v651
        %v892 = vpack.c.b16 %v660, %v652
        %v893 = vpack.c.b16 %v661, %v653
        %v894 = vpack.c.b16 %v670, %v662
        %v895 = vpack.c.b16 %v671, %v663
        %v896 = vpack.c.b16 %v672, %v664
        %v897 = vpack.c.b16 %v673, %v665
        %v898 = vpack.c.b16 %v674, %v666
        %v899 = vpack.c.b16 %v675, %v667
        %v900 = vpack.c.b16 %v676, %v668
        %v901 = vpack.c.b16 %v677, %v669
        %v902 = vpack.c.b16 %v686, %v678
        %v903 = vpack.c.b16 %v687, %v679
        %v904 = vpack.c.b16 %v688, %v680
        %v905 = vpack.c.b16 %v689, %v681
        %v906 = vpack.c.b16 %v690, %v682
        %v907 = vpack.c.b16 %v691, %v683
        %v908 = vpack.c.b16 %v692, %v684
        %v909 = vpack.c.b16 %v693, %v685
        %v910 = vpack.c.b16 %v702, %v694
        %v911 = vpack.c.b16 %v703, %v695
        %v912 = vpack.c.b16 %v704, %v696
        %v913 = vpack.c.b16 %v705, %v697
        %v914 = vpack.c.b16 %v706, %v698
        %v915 = vpack.c.b16 %v707, %v699
        %v916 = vpack.c.b16 %v708, %v700
        %v917 = vpack.c.b16 %v709, %v701
        %v918 = vpack.c.b16 %v718, %v710
        %v919 = vpack.c.b16 %v719, %v711
        %v920 = vpack.c.b16 %v720, %v712
        %v921 = vpack.c.b16 %v721, %v713
        %v922 = vpack.c.b16 %v722, %v714
        %v923 = vpack.c.b16 %v723, %v715
        %v924 = vpack.c.b16 %v724, %v716
        %v925 = vpack.c.b16 %v725, %v717
        %v926 = vpack.c.b16 %v734, %v726
        %v927 = vpack.c.b16 %v735, %v727
        %v928 = vpack.c.b16 %v736, %v728
        %v929 = vpack.c.b16 %v737, %v729
        %v930 = vpack.c.b16 %v738, %v730
        %v931 = vpack.c.b16 %v739, %v731
        %v932 = vpack.c.b16 %v740, %v732
        %v933 = vpack.c.b16 %v741, %v733
        %v934 = vpack.c.b16 %v750, %v742
        %v935 = vpack.c.b16 %v751, %v743
        %v936 = vpack.c.b16 %v752, %v744
        %v937 = vpack.c.b16 %v753, %v745
        %v938 = vpack.c.b16 %v754, %v746
        %v939 = vpack.c.b16 %v755, %v747
        %v940 = vpack.c.b16 %v756, %v748
        %v941 = vpack.c.b16 %v757, %v749
        %v942 = vpack.c.b16 %v766, %v758
        %v943 = vpack.c.b16 %v767, %v759
        %v944 = vpack.c.b16 %v768, %v760
        %v945 = vpack.c.b16 %v769, %v761
        %v946 = vpack.c.b16 %v770, %v762
        %v947 = vpack.c.b16 %v771, %v763
        %v948 = vpack.c.b16 %v772, %v764
        %v949 = vpack.c.b16 %v773, %v765
        %v950 = vpack.c.b16 %v782, %v774
        %v951 = vpack.c.b16 %v783, %v775
        %v952 = vpack.c.b16 %v784, %v776
        %v953 = vpack.c.b16 %v785, %v777
        %v954 = vpack.c.b16 %v786, %v778
        %v955 = vpack.c.b16 %v787, %v779
        %v956 = vpack.c.b16 %v788, %v780
        %v957 = vpack.c.b16 %v789, %v781
        %v958 = vpack.c.b16 %v798, %v790
        %v959 = vpack.c.b16 %v799, %v791
        %v960 = vpack.c.b16 %v800, %v792
        %v961 = vpack.c.b16 %v801, %v793
        %v962 = vpack.c.b16 %v802, %v794
        %v963 = vpack.c.b16 %v803, %v795
        %v964 = vpack.c.b16 %v804, %v796
        %v965 = vpack.c.b16 %v805, %v797
        %v966 = vpack.c.b16 %v814, %v806
        %v967 = vpack.c.b16 %v815, %v807
        %v968 = vpack.c.b16 %v816, %v808
        %v969 = vpack.c.b16 %v817, %v809
        %v970 = vpack.c.b16 %v818, %v810
        %v971 = vpack.c.b16 %v819, %v811
        %v972 = vpack.c.b16 %v820, %v812
        %v973 = vpack.c.b16 %v821, %v813
        %v974 = vpack.c.b16 %v830, %v822
        %v975 = vpack.c.b16 %v831, %v823
        %v976 = vpack.c.b16 %v832, %v824
        %v977 = vpack.c.b16 %v833, %v825
        %v978 = vpack.c.b16 %v834, %v826
        %v979 = vpack.c.b16 %v835, %v827
        %v980 = vpack.c.b16 %v836, %v828
        %v981 = vpack.c.b16 %v837, %v829
        %v982 = vpack.c.b16 %v846, %v838
        %v983 = vpack.c.b16 %v847, %v839
        %v984 = vpack.c.b16 %v848, %v840
        %v985 = vpack.c.b16 %v849, %v841
        %v986 = vpack.c.b16 %v850, %v842
        %v987 = vpack.c.b16 %v851, %v843
        %v988 = vpack.c.b16 %v852, %v844
        %v989 = vpack.c.b16 %v853, %v845
        %v990 = vpack.c.b16 %v862, %v854
        %v991 = vpack.c.b16 %v863, %v855
        %v992 = vpack.c.b16 %v864, %v856
        %v993 = vpack.c.b16 %v865, %v857
        %v994 = vpack.c.b16 %v866, %v858
        %v995 = vpack.c.b16 %v867, %v859
        %v996 = vpack.c.b16 %v868, %v860
        %v997 = vpack.c.b16 %v869, %v861
        %v1254 = vunpack.c.l.b16 %v358
        %v1255 = vunpack.c.l.b16 %v359
        %v1256 = vunpack.c.l.b16 %v360
        %v1257 = vunpack.c.l.b16 %v361
        %v1258 = vunpack.c.l.b16 %v362
        %v1259 = vunpack.c.l.b16 %v363
        %v1260 = vunpack.c.l.b16 %v364
        %v1261 = vunpack.c.l.b16 %v365
        %v1262 = vunpack.c.l.b16 %v366
        %v1263 = vunpack.c.l.b16 %v367
        %v1264 = vunpack.c.l.b16 %v368
        %v1265 = vunpack.c.l.b16 %v369
        %v1266 = vunpack.c.l.b16 %v370
        %v1267 = vunpack.c.l.b16 %v371
        %v1268 = vunpack.c.l.b16 %v372
        %v1269 = vunpack.c.l.b16 %v373
        %v1270 = vunpack.c.l.b16 %v374
        %v1271 = vunpack.c.l.b16 %v375
        %v1272 = vunpack.c.l.b16 %v376
        %v1273 = vunpack.c.l.b16 %v377
        %v1274 = vunpack.c.l.b16 %v378
        %v1275 = vunpack.c.l.b16 %v379
        %v1276 = vunpack.c.l.b16 %v380
        %v1277 = vunpack.c.l.b16 %v381
        %v1278 = vunpack.c.l.b16 %v382
        %v1279 = vunpack.c.l.b16 %v383
        %v1280 = vunpack.c.l.b16 %v384
        %v1281 = vunpack.c.l.b16 %v385
        %v1282 = vunpack.c.l.b16 %v386
        %v1283 = vunpack.c.l.b16 %v387
        %v1284 = vunpack.c.l.b16 %v388
        %v1285 = vunpack.c.l.b16 %v389
        %v1286 = vunpack.c.l.b16 %v390
        %v1287 = vunpack.c.l.b16 %v391
        %v1288 = vunpack.c.l.b16 %v392
        %v1289 = vunpack.c.l.b16 %v393
        %v1290 = vunpack.c.l.b16 %v394
        %v1291 = vunpack.c.l.b16 %v395
        %v1292 = vunpack.c.l.b16 %v396
        %v1293 = vunpack.c.l.b16 %v397
        %v1294 = vunpack.c.l.b16 %v398
        %v1295 = vunpack.c.l.b16 %v399
        %v1296 = vunpack.c.l.b16 %v400
        %v1297 = vunpack.c.l.b16 %v401
        %v1298 = vunpack.c.l.b16 %v402
        %v1299 = vunpack.c.l.b16 %v403
        %v1300 = vunpack.c.l.b16 %v404
        %v1301 = vunpack.c.l.b16 %v405
        %v1302 = vunpack.c.l.b16 %v406
        %v1303 = vunpack.c.l.b16 %v407
        %v1304 = vunpack.c.l.b16 %v408
        %v1305 = vunpack.c.l.b16 %v409
        %v1306 = vunpack.c.l.b16 %v410
        %v1307 = vunpack.c.l.b16 %v411
        %v1308 = vunpack.c.l.b16 %v412
        %v1309 = vunpack.c.l.b16 %v413
        %v1310 = vunpack.c.l.b16 %v414
        %v1311 = vunpack.c.l.b16 %v415
        %v1312 = vunpack.c.l.b16 %v416
        %v1313 = vunpack.c.l.b16 %v417
        %v1314 = vunpack.c.l.b16 %v418
        %v1315 = vunpack.c.l.b16 %v419
        %v1316 = vunpack.c.l.b16 %v420
        %v1317 = vunpack.c.l.b16 %v421
        %v1318 = vunpack.c.l.b16 %v422
        %v1319 = vunpack.c.l.b16 %v423
        %v1320 = vunpack.c.l.b16 %v424
        %v1321 = vunpack.c.l.b16 %v425
        %v1322 = vunpack.c.l.b16 %v426
        %v1323 = vunpack.c.l.b16 %v427
        %v1324 = vunpack.c.l.b16 %v428
        %v1325 = vunpack.c.l.b16 %v429
        %v1326 = vunpack.c.l.b16 %v430
        %v1327 = vunpack.c.l.b16 %v431
        %v1328 = vunpack.c.l.b16 %v432
        %v1329 = vunpack.c.l.b16 %v433
        %v1330 = vunpack.c.l.b16 %v434
        %v1331 = vunpack.c.l.b16 %v435
        %v1332 = vunpack.c.l.b16 %v436
        %v1333 = vunpack.c.l.b16 %v437
        %v1334 = vunpack.c.l.b16 %v438
        %v1335 = vunpack.c.l.b16 %v439
        %v1336 = vunpack.c.l.b16 %v440
        %v1337 = vunpack.c.l.b16 %v441
        %v1338 = vunpack.c.l.b16 %v442
        %v1339 = vunpack.c.l.b16 %v443
        %v1340 = vunpack.c.l.b16 %v444
        %v1341 = vunpack.c.l.b16 %v445
        %v1342 = vunpack.c.l.b16 %v446
        %v1343 = vunpack.c.l.b16 %v447
        %v1344 = vunpack.c.l.b16 %v448
        %v1345 = vunpack.c.l.b16 %v449
        %v1346 = vunpack.c.l.b16 %v450
        %v1347 = vunpack.c.l.b16 %v451
        %v1348 = vunpack.c.l.b16 %v452
        %v1349 = vunpack.c.l.b16 %v453
        %v1350 = vunpack.c.l.b16 %v454
        %v1351 = vunpack.c.l.b16 %v455
        %v1352 = vunpack.c.l.b16 %v456
        %v1353 = vunpack.c.l.b16 %v457
        %v1354 = vunpack.c.l.b16 %v458
        %v1355 = vunpack.c.l.b16 %v459
        %v1356 = vunpack.c.l.b16 %v460
        %v1357 = vunpack.c.l.b16 %v461
        %v1358 = vunpack.c.l.b16 %v462
        %v1359 = vunpack.c.l.b16 %v463
        %v1360 = vunpack.c.l.b16 %v464
        %v1361 = vunpack.c.l.b16 %v465
        %v1362 = vunpack.c.l.b16 %v466
        %v1363 = vunpack.c.l.b16 %v467
        %v1364 = vunpack.c.l.b16 %v468
        %v1365 = vunpack.c.l.b16 %v469
        %v1366 = vunpack.c.l.b16 %v470
        %v1367 = vunpack.c.l.b16 %v471
        %v1368 = vunpack.c.l.b16 %v472
        %v1369 = vunpack.c.l.b16 %v473
        %v1370 = vunpack.c.l.b16 %v474
        %v1371 = vunpack.c.l.b16 %v475
        %v1372 = vunpack.c.l.b16 %v476
        %v1373 = vunpack.c.l.b16 %v477
        %v1374 = vunpack.c.l.b16 %v478
        %v1375 = vunpack.c.l.b16 %v479
        %v1376 = vunpack.c.l.b16 %v480
        %v1377 = vunpack.c.l.b16 %v481
        %v1378 = vunpack.c.l.b16 %v482
        %v1379 = vunpack.c.l.b16 %v483
        %v1380 = vunpack.c.l.b16 %v484
        %v1381 = vunpack.c.l.b16 %v485
        %v1382 = vpack.c.b16 %v1255, %v1254
        %v1383 = vpack.c.b16 %v1257, %v1256
        %v1384 = vpack.c.b16 %v1259, %v1258
        %v1385 = vpack.c.b16 %v1261, %v1260
        %v1386 = vpack.c.b16 %v1263, %v1262
        %v1387 = vpack.c.b16 %v1265, %v1264
        %v1388 = vpack.c.b16 %v1267, %v1266
        %v1389 = vpack.c.b16 %v1269, %v1268
        %v1390 = vpack.c.b16 %v1271, %v1270
        %v1391 = vpack.c.b16 %v1273, %v1272
        %v1392 = vpack.c.b16 %v1275, %v1274
        %v1393 = vpack.c.b16 %v1277, %v1276
        %v1394 = vpack.c.b16 %v1279, %v1278
        %v1395 = vpack.c.b16 %v1281, %v1280
        %v1396 = vpack.c.b16 %v1283, %v1282
        %v1397 = vpack.c.b16 %v1285, %v1284
        %v1398 = vpack.c.b16 %v1287, %v1286
        %v1399 = vpack.c.b16 %v1289, %v1288
        %v1400 = vpack.c.b16 %v1291, %v1290
        %v1401 = vpack.c.b16 %v1293, %v1292
        %v1402 = vpack.c.b16 %v1295, %v1294
        %v1403 = vpack.c.b16 %v1297, %v1296
        %v1404 = vpack.c.b16 %v1299, %v1298
        %v1405 = vpack.c.b16 %v1301, %v1300
        %v1406 = vpack.c.b16 %v1303, %v1302
        %v1407 = vpack.c.b16 %v1305, %v1304
        %v1408 = vpack.c.b16 %v1307, %v1306
        %v1409 = vpack.c.b16 %v1309, %v1308
        %v1410 = vpack.c.b16 %v1311, %v1310
        %v1411 = vpack.c.b16 %v1313, %v1312
        %v1412 = vpack.c.b16 %v1315, %v1314
        %v1413 = vpack.c.b16 %v1317, %v1316
        %v1414 = vpack.c.b16 %v1319, %v1318
        %v1415 = vpack.c.b16 %v1321, %v1320
        %v1416 = vpack.c.b16 %v1323, %v1322
        %v1417 = vpack.c.b16 %v1325, %v1324
        %v1418 = vpack.c.b16 %v1327, %v1326
        %v1419 = vpack.c.b16 %v1329, %v1328
        %v1420 = vpack.c.b16 %v1331, %v1330
        %v1421 = vpack.c.b16 %v1333, %v1332
        %v1422 = vpack.c.b16 %v1335, %v1334
        %v1423 = vpack.c.b16 %v1337, %v1336
        %v1424 = vpack.c.b16 %v1339, %v1338
        %v1425 = vpack.c.b16 %v1341, %v1340
        %v1426 = vpack.c.b16 %v1343, %v1342
        %v1427 = vpack.c.b16 %v1345, %v1344
        %v1428 = vpack.c.b16 %v1347, %v1346
        %v1429 = vpack.c.b16 %v1349, %v1348
        %v1430 = vpack.c.b16 %v1351, %v1350
        %v1431 = vpack.c.b16 %v1353, %v1352
        %v1432 = vpack.c.b16 %v1355, %v1354
        %v1433 = vpack.c.b16 %v1357, %v1356
        %v1434 = vpack.c.b16 %v1359, %v1358
        %v1435 = vpack.c.b16 %v1361, %v1360
        %v1436 = vpack.c.b16 %v1363, %v1362
        %v1437 = vpack.c.b16 %v1365, %v1364
        %v1438 = vpack.c.b16 %v1367, %v1366
        %v1439 = vpack.c.b16 %v1369, %v1368
        %v1440 = vpack.c.b16 %v1371, %v1370
        %v1441 = vpack.c.b16 %v1373, %v1372
        %v1442 = vpack.c.b16 %v1375, %v1374
        %v1443 = vpack.c.b16 %v1377, %v1376
        %v1444 = vpack.c.b16 %v1379, %v1378
        %v1445 = vpack.c.b16 %v1381, %v1380
        %1510 = vmatprep.subr.bf16.mxu0 0
        %1511 = vmatpush1.bf16.msra.mxu0 %v1382
        %1512 = vmatprep.subr.bf16.mxu0 0
        %1513 = vmatpush1.bf16.msra.mxu0 %v1383
        %1514 = vmatprep.subr.bf16.mxu0 0
        %1515 = vmatpush1.bf16.msra.mxu0 %v1384
        %1516 = vmatprep.subr.bf16.mxu0 0
        %1517 = vmatpush1.bf16.msra.mxu0 %v1385
        %1518 = vmatprep.subr.bf16.mxu0 0
        %1519 = vmatpush1.bf16.msra.mxu0 %v1386
        %1520 = vmatprep.subr.bf16.mxu0 0
        %1521 = vmatpush1.bf16.msra.mxu0 %v1387
        %1522 = vmatprep.subr.bf16.mxu0 0
        %1523 = vmatpush1.bf16.msra.mxu0 %v1388
        %1524 = vmatprep.subr.bf16.mxu0 0
        %1525 = vmatpush1.bf16.msra.mxu0 %v1389
        %1526 = vmatprep.subr.bf16.mxu0 0
        %1527 = vmatpush1.bf16.msra.mxu0 %v1390
        %1528 = vmatprep.subr.bf16.mxu0 0
        %1529 = vmatpush1.bf16.msra.mxu0 %v1391
        %1530 = vmatprep.subr.bf16.mxu0 0
        %1531 = vmatpush1.bf16.msra.mxu0 %v1392
        %1532 = vmatprep.subr.bf16.mxu0 0
        %1533 = vmatpush1.bf16.msra.mxu0 %v1393
        %1534 = vmatprep.subr.bf16.mxu0 0
        %1535 = vmatpush1.bf16.msra.mxu0 %v1394
        %1536 = vmatprep.subr.bf16.mxu0 0
        %1537 = vmatpush1.bf16.msra.mxu0 %v1395
        %1538 = vmatprep.subr.bf16.mxu0 0
        %1539 = vmatpush1.bf16.msra.mxu0 %v1396
        %1540 = vmatprep.subr.bf16.mxu0 0
        %1541 = vmatpush1.bf16.msra.mxu0 %v1397
        %1542 = vmatprep.mubr.bf16.mxu0 %v871
        %1543 = vmatmul.mubr.bf16.gmra.mrb[0].mxu0 %v870
        %v1544 = vpop.f32.mrb[0].mxu0
        %v1545 = vadd.f32 0.0, %v1544
        %v1546 = vpop.f32.mrb[0].mxu0
        %v1547 = vpop.f32.mrb[0].mxu0
        %v1548 = vadd.f32 0.0, %v1547
        %v1549 = vpop.f32.mrb[0].mxu0
        %1550 = vmatprep.mubr.bf16.mxu0 %v879
        %1551 = vmatmul.mubr.bf16.gmra.mrb[0].mxu0 %v878
        %v1552 = vpop.f32.mrb[0].mxu0
        %v1553 = vadd.f32 0.0, %v1552
        %v1554 = vpop.f32.mrb[0].mxu0
        %v1555 = vpop.f32.mrb[0].mxu0
        %v1556 = vadd.f32 0.0, %v1555
        %v1557 = vpop.f32.mrb[0].mxu0
        %1558 = vmatprep.mubr.bf16.mxu0 %v887
        %1559 = vmatmul.mubr.bf16.gmra.mrb[0].mxu0 %v886
        %v1560 = vpop.f32.mrb[0].mxu0
        %v1561 = vadd.f32 0.0, %v1560
        %v1562 = vpop.f32.mrb[0].mxu0
        %v1563 = vpop.f32.mrb[0].mxu0
        %v1564 = vadd.f32 0.0, %v1563
        %v1565 = vpop.f32.mrb[0].mxu0
        %1566 = vmatprep.mubr.bf16.mxu0 %v895
        %1567 = vmatmul.mubr.bf16.gmra.mrb[0].mxu0 %v894
        %v1568 = vpop.f32.mrb[0].mxu0
        %v1569 = vadd.f32 0.0, %v1568
        %v1570 = vpop.f32.mrb[0].mxu0
        %v1571 = vpop.f32.mrb[0].mxu0
        %v1572 = vadd.f32 0.0, %v1571
        %v1573 = vpop.f32.mrb[0].mxu0
        %1574 = vmatprep.mubr.bf16.mxu0 %v903
        %1575 = vmatmul.mubr.bf16.gmra.mrb[0].mxu0 %v902
        %v1576 = vpop.f32.mrb[0].mxu0
        %v1577 = vadd.f32 0.0, %v1576
        %v1578 = vpop.f32.mrb[0].mxu0
        %v1579 = vpop.f32.mrb[0].mxu0
        %v1580 = vadd.f32 0.0, %v1579
        %v1581 = vpop.f32.mrb[0].mxu0
        %1582 = vmatprep.mubr.bf16.mxu0 %v911
        %1583 = vmatmul.mubr.bf16.gmra.mrb[0].mxu0 %v910
        %v1584 = vpop.f32.mrb[0].mxu0
        %v1585 = vadd.f32 0.0, %v1584
        %v1586 = vpop.f32.mrb[0].mxu0
        %v1587 = vpop.f32.mrb[0].mxu0
        %v1588 = vadd.f32 0.0, %v1587
        %v1589 = vpop.f32.mrb[0].mxu0
        %1590 = vmatprep.mubr.bf16.mxu0 %v919
        %1591 = vmatmul.mubr.bf16.gmra.mrb[0].mxu0 %v918
        %v1592 = vpop.f32.mrb[0].mxu0
        %v1593 = vadd.f32 0.0, %v1592
        %v1594 = vpop.f32.mrb[0].mxu0
        %v1595 = vpop.f32.mrb[0].mxu0
        %v1596 = vadd.f32 0.0, %v1595
        %v1597 = vpop.f32.mrb[0].mxu0
        %1598 = vmatprep.mubr.bf16.mxu0 %v927
        %1599 = vmatmul.mubr.bf16.gmra.mrb[0].mxu0 %v926
        %v1600 = vpop.f32.mrb[0].mxu0
        %v1601 = vadd.f32 0.0, %v1600
        %v1602 = vpop.f32.mrb[0].mxu0
        %v1603 = vpop.f32.mrb[0].mxu0
        %v1604 = vadd.f32 0.0, %v1603
        %v1605 = vpop.f32.mrb[0].mxu0
        %1606 = vmatprep.mubr.bf16.mxu0 %v935
        %1607 = vmatmul.mubr.bf16.gmra.mrb[0].mxu0 %v934
        %v1608 = vpop.f32.mrb[0].mxu0
        %v1609 = vadd.f32 0.0, %v1608
        %v1610 = vpop.f32.mrb[0].mxu0
        %v1611 = vpop.f32.mrb[0].mxu0
        %v1612 = vadd.f32 0.0, %v1611
        %v1613 = vpop.f32.mrb[0].mxu0
        %1614 = vmatprep.mubr.bf16.mxu0 %v943
        %1615 = vmatmul.mubr.bf16.gmra.mrb[0].mxu0 %v942
        %v1616 = vpop.f32.mrb[0].mxu0
        %v1617 = vadd.f32 0.0, %v1616
        %v1618 = vpop.f32.mrb[0].mxu0
        %v1619 = vpop.f32.mrb[0].mxu0
        %v1620 = vadd.f32 0.0, %v1619
        %v1621 = vpop.f32.mrb[0].mxu0
        %1622 = vmatprep.mubr.bf16.mxu0 %v951
        %1623 = vmatmul.mubr.bf16.gmra.mrb[0].mxu0 %v950
        %v1624 = vpop.f32.mrb[0].mxu0
        %v1625 = vadd.f32 0.0, %v1624
        %v1626 = vpop.f32.mrb[0].mxu0
        %v1627 = vpop.f32.mrb[0].mxu0
        %v1628 = vadd.f32 0.0, %v1627
        %v1629 = vpop.f32.mrb[0].mxu0
        %1630 = vmatprep.mubr.bf16.mxu0 %v959
        %1631 = vmatmul.mubr.bf16.gmra.mrb[0].mxu0 %v958
        %v1632 = vpop.f32.mrb[0].mxu0
        %v1633 = vadd.f32 0.0, %v1632
        %v1634 = vpop.f32.mrb[0].mxu0
        %v1635 = vpop.f32.mrb[0].mxu0
        %v1636 = vadd.f32 0.0, %v1635
        %v1637 = vpop.f32.mrb[0].mxu0
        %1638 = vmatprep.mubr.bf16.mxu0 %v967
        %1639 = vmatmul.mubr.bf16.gmra.mrb[0].mxu0 %v966
        %v1640 = vpop.f32.mrb[0].mxu0
        %v1641 = vadd.f32 0.0, %v1640
        %v1642 = vpop.f32.mrb[0].mxu0
        %v1643 = vpop.f32.mrb[0].mxu0
        %v1644 = vadd.f32 0.0, %v1643
        %v1645 = vpop.f32.mrb[0].mxu0
        %1646 = vmatprep.mubr.bf16.mxu0 %v975
        %1647 = vmatmul.mubr.bf16.gmra.mrb[0].mxu0 %v974
        %v1648 = vpop.f32.mrb[0].mxu0
        %v1649 = vadd.f32 0.0, %v1648
        %v1650 = vpop.f32.mrb[0].mxu0
        %v1651 = vpop.f32.mrb[0].mxu0
        %v1652 = vadd.f32 0.0, %v1651
        %v1653 = vpop.f32.mrb[0].mxu0
        %1654 = vmatprep.mubr.bf16.mxu0 %v983
        %1655 = vmatmul.mubr.bf16.gmra.mrb[0].mxu0 %v982
        %v1656 = vpop.f32.mrb[0].mxu0
        %v1657 = vadd.f32 0.0, %v1656
        %v1658 = vpop.f32.mrb[0].mxu0
        %v1659 = vpop.f32.mrb[0].mxu0
        %v1660 = vadd.f32 0.0, %v1659
        %v1661 = vpop.f32.mrb[0].mxu0
        %1662 = vmatprep.mubr.bf16.mxu0 %v991
        %1663 = vmatmul.mubr.bf16.gmra.mrb[0].mxu0 %v990
        %v1664 = vpop.f32.mrb[0].mxu0
        %v1665 = vadd.f32 0.0, %v1664
        %v1666 = vpop.f32.mrb[0].mxu0
        %v1667 = vpop.f32.mrb[0].mxu0
        %v1668 = vadd.f32 0.0, %v1667
        %v1669 = vpop.f32.mrb[0].mxu0
        %1670 = vdwg.mxu0
        %1671 = vmatprep.subr.bf16.mxu0 0
        %1672 = vmatpush1.bf16.msra.mxu0 %v1398
        %1673 = vmatprep.subr.bf16.mxu0 0
        %1674 = vmatpush1.bf16.msra.mxu0 %v1399
        %1675 = vmatprep.subr.bf16.mxu0 0
        %1676 = vmatpush1.bf16.msra.mxu0 %v1400
        %1677 = vmatprep.subr.bf16.mxu0 0
        %1678 = vmatpush1.bf16.msra.mxu0 %v1401
        %1679 = vmatprep.subr.bf16.mxu0 0
        %1680 = vmatpush1.bf16.msra.mxu0 %v1402
        %1681 = vmatprep.subr.bf16.mxu0 0
        %1682 = vmatpush1.bf16.msra.mxu0 %v1403
        %1683 = vmatprep.subr.bf16.mxu0 0
        %1684 = vmatpush1.bf16.msra.mxu0 %v1404
        %1685 = vmatprep.subr.bf16.mxu0 0
        %1686 = vmatpush1.bf16.msra.mxu0 %v1405
        %1687 = vmatprep.subr.bf16.mxu0 0
        %1688 = vmatpush1.bf16.msra.mxu0 %v1406
        %1689 = vmatprep.subr.bf16.mxu0 0
        %1690 = vmatpush1.bf16.msra.mxu0 %v1407
        %1691 = vmatprep.subr.bf16.mxu0 0
        %1692 = vmatpush1.bf16.msra.mxu0 %v1408
        %1693 = vmatprep.subr.bf16.mxu0 0
        %1694 = vmatpush1.bf16.msra.mxu0 %v1409
        %1695 = vmatprep.subr.bf16.mxu0 0
        %1696 = vmatpush1.bf16.msra.mxu0 %v1410
        %1697 = vmatprep.subr.bf16.mxu0 0
        %1698 = vmatpush1.bf16.msra.mxu0 %v1411
        %1699 = vmatprep.subr.bf16.mxu0 0
        %1700 = vmatpush1.bf16.msra.mxu0 %v1412
        %1701 = vmatprep.subr.bf16.mxu0 0
        %1702 = vmatpush1.bf16.msra.mxu0 %v1413
        %1703 = vmatprep.mubr.bf16.mxu0 %v873
        %1704 = vmatmul.mubr.bf16.gmra.mrb[0].mxu0 %v872
        %v1705 = vpop.f32.mrb[0].mxu0
        %v1706 = vadd.f32 %v1545, %v1705
        %v1707 = vpop.f32.mrb[0].mxu0
        %v1708 = vpop.f32.mrb[0].mxu0
        %v1709 = vadd.f32 %v1548, %v1708
        %v1710 = vpop.f32.mrb[0].mxu0
        %1711 = vmatprep.mubr.bf16.mxu0 %v881
        %1712 = vmatmul.mubr.bf16.gmra.mrb[0].mxu0 %v880
        %v1713 = vpop.f32.mrb[0].mxu0
        %v1714 = vadd.f32 %v1553, %v1713
        %v1715 = vpop.f32.mrb[0].mxu0
        %v1716 = vpop.f32.mrb[0].mxu0
        %v1717 = vadd.f32 %v1556, %v1716
        %v1718 = vpop.f32.mrb[0].mxu0
        %1719 = vmatprep.mubr.bf16.mxu0 %v889
        %1720 = vmatmul.mubr.bf16.gmra.mrb[0].mxu0 %v888
        %v1721 = vpop.f32.mrb[0].mxu0
        %v1722 = vadd.f32 %v1561, %v1721
        %v1723 = vpop.f32.mrb[0].mxu0
        %v1724 = vpop.f32.mrb[0].mxu0
        %v1725 = vadd.f32 %v1564, %v1724
        %v1726 = vpop.f32.mrb[0].mxu0
        %1727 = vmatprep.mubr.bf16.mxu0 %v897
        %1728 = vmatmul.mubr.bf16.gmra.mrb[0].mxu0 %v896
        %v1729 = vpop.f32.mrb[0].mxu0
        %v1730 = vadd.f32 %v1569, %v1729
        %v1731 = vpop.f32.mrb[0].mxu0
        %v1732 = vpop.f32.mrb[0].mxu0
        %v1733 = vadd.f32 %v1572, %v1732
        %v1734 = vpop.f32.mrb[0].mxu0
        %1735 = vmatprep.mubr.bf16.mxu0 %v905
        %1736 = vmatmul.mubr.bf16.gmra.mrb[0].mxu0 %v904
        %v1737 = vpop.f32.mrb[0].mxu0
        %v1738 = vadd.f32 %v1577, %v1737
        %v1739 = vpop.f32.mrb[0].mxu0
        %v1740 = vpop.f32.mrb[0].mxu0
        %v1741 = vadd.f32 %v1580, %v1740
        %v1742 = vpop.f32.mrb[0].mxu0
        %1743 = vmatprep.mubr.bf16.mxu0 %v913
        %1744 = vmatmul.mubr.bf16.gmra.mrb[0].mxu0 %v912
        %v1745 = vpop.f32.mrb[0].mxu0
        %v1746 = vadd.f32 %v1585, %v1745
        %v1747 = vpop.f32.mrb[0].mxu0
        %v1748 = vpop.f32.mrb[0].mxu0
        %v1749 = vadd.f32 %v1588, %v1748
        %v1750 = vpop.f32.mrb[0].mxu0
        %1751 = vmatprep.mubr.bf16.mxu0 %v921
        %1752 = vmatmul.mubr.bf16.gmra.mrb[0].mxu0 %v920
        %v1753 = vpop.f32.mrb[0].mxu0
        %v1754 = vadd.f32 %v1593, %v1753
        %v1755 = vpop.f32.mrb[0].mxu0
        %v1756 = vpop.f32.mrb[0].mxu0
        %v1757 = vadd.f32 %v1596, %v1756
        %v1758 = vpop.f32.mrb[0].mxu0
        %1759 = vmatprep.mubr.bf16.mxu0 %v929
        %1760 = vmatmul.mubr.bf16.gmra.mrb[0].mxu0 %v928
        %v1761 = vpop.f32.mrb[0].mxu0
        %v1762 = vadd.f32 %v1601, %v1761
        %v1763 = vpop.f32.mrb[0].mxu0
        %v1764 = vpop.f32.mrb[0].mxu0
        %v1765 = vadd.f32 %v1604, %v1764
        %v1766 = vpop.f32.mrb[0].mxu0
        %1767 = vmatprep.mubr.bf16.mxu0 %v937
        %1768 = vmatmul.mubr.bf16.gmra.mrb[0].mxu0 %v936
        %v1769 = vpop.f32.mrb[0].mxu0
        %v1770 = vadd.f32 %v1609, %v1769
        %v1771 = vpop.f32.mrb[0].mxu0
        %v1772 = vpop.f32.mrb[0].mxu0
        %v1773 = vadd.f32 %v1612, %v1772
        %v1774 = vpop.f32.mrb[0].mxu0
        %1775 = vmatprep.mubr.bf16.mxu0 %v945
        %1776 = vmatmul.mubr.bf16.gmra.mrb[0].mxu0 %v944
        %v1777 = vpop.f32.mrb[0].mxu0
        %v1778 = vadd.f32 %v1617, %v1777
        %v1779 = vpop.f32.mrb[0].mxu0
        %v1780 = vpop.f32.mrb[0].mxu0
        %v1781 = vadd.f32 %v1620, %v1780
        %v1782 = vpop.f32.mrb[0].mxu0
        %1783 = vmatprep.mubr.bf16.mxu0 %v953
        %1784 = vmatmul.mubr.bf16.gmra.mrb[0].mxu0 %v952
        %v1785 = vpop.f32.mrb[0].mxu0
        %v1786 = vadd.f32 %v1625, %v1785
        %v1787 = vpop.f32.mrb[0].mxu0
        %v1788 = vpop.f32.mrb[0].mxu0
        %v1789 = vadd.f32 %v1628, %v1788
        %v1790 = vpop.f32.mrb[0].mxu0
        %1791 = vmatprep.mubr.bf16.mxu0 %v961
        %1792 = vmatmul.mubr.bf16.gmra.mrb[0].mxu0 %v960
        %v1793 = vpop.f32.mrb[0].mxu0
        %v1794 = vadd.f32 %v1633, %v1793
        %v1795 = vpop.f32.mrb[0].mxu0
        %v1796 = vpop.f32.mrb[0].mxu0
        %v1797 = vadd.f32 %v1636, %v1796
        %v1798 = vpop.f32.mrb[0].mxu0
        %1799 = vmatprep.mubr.bf16.mxu0 %v969
        %1800 = vmatmul.mubr.bf16.gmra.mrb[0].mxu0 %v968
        %v1801 = vpop.f32.mrb[0].mxu0
        %v1802 = vadd.f32 %v1641, %v1801
        %v1803 = vpop.f32.mrb[0].mxu0
        %v1804 = vpop.f32.mrb[0].mxu0
        %v1805 = vadd.f32 %v1644, %v1804
        %v1806 = vpop.f32.mrb[0].mxu0
        %1807 = vmatprep.mubr.bf16.mxu0 %v977
        %1808 = vmatmul.mubr.bf16.gmra.mrb[0].mxu0 %v976
        %v1809 = vpop.f32.mrb[0].mxu0
        %v1810 = vadd.f32 %v1649, %v1809
        %v1811 = vpop.f32.mrb[0].mxu0
        %v1812 = vpop.f32.mrb[0].mxu0
        %v1813 = vadd.f32 %v1652, %v1812
        %v1814 = vpop.f32.mrb[0].mxu0
        %1815 = vmatprep.mubr.bf16.mxu0 %v985
        %1816 = vmatmul.mubr.bf16.gmra.mrb[0].mxu0 %v984
        %v1817 = vpop.f32.mrb[0].mxu0
        %v1818 = vadd.f32 %v1657, %v1817
        %v1819 = vpop.f32.mrb[0].mxu0
        %v1820 = vpop.f32.mrb[0].mxu0
        %v1821 = vadd.f32 %v1660, %v1820
        %v1822 = vpop.f32.mrb[0].mxu0
        %1823 = vmatprep.mubr.bf16.mxu0 %v993
        %1824 = vmatmul.mubr.bf16.gmra.mrb[0].mxu0 %v992
        %v1825 = vpop.f32.mrb[0].mxu0
        %v1826 = vadd.f32 %v1665, %v1825
        %v1827 = vpop.f32.mrb[0].mxu0
        %v1828 = vpop.f32.mrb[0].mxu0
        %v1829 = vadd.f32 %v1668, %v1828
        %v1830 = vpop.f32.mrb[0].mxu0
        %1831 = vdwg.mxu0
        %1832 = vmatprep.subr.bf16.mxu0 0
        %1833 = vmatpush1.bf16.msra.mxu0 %v1414
        %1834 = vmatprep.subr.bf16.mxu0 0
        %1835 = vmatpush1.bf16.msra.mxu0 %v1415
        %1836 = vmatprep.subr.bf16.mxu0 0
        %1837 = vmatpush1.bf16.msra.mxu0 %v1416
        %1838 = vmatprep.subr.bf16.mxu0 0
        %1839 = vmatpush1.bf16.msra.mxu0 %v1417
        %1840 = vmatprep.subr.bf16.mxu0 0
        %1841 = vmatpush1.bf16.msra.mxu0 %v1418
        %1842 = vmatprep.subr.bf16.mxu0 0
        %1843 = vmatpush1.bf16.msra.mxu0 %v1419
        %1844 = vmatprep.subr.bf16.mxu0 0
        %1845 = vmatpush1.bf16.msra.mxu0 %v1420
        %1846 = vmatprep.subr.bf16.mxu0 0
        %1847 = vmatpush1.bf16.msra.mxu0 %v1421
        %1848 = vmatprep.subr.bf16.mxu0 0
        %1849 = vmatpush1.bf16.msra.mxu0 %v1422
        %1850 = vmatprep.subr.bf16.mxu0 0
        %1851 = vmatpush1.bf16.msra.mxu0 %v1423
        %1852 = vmatprep.subr.bf16.mxu0 0
        %1853 = vmatpush1.bf16.msra.mxu0 %v1424
        %1854 = vmatprep.subr.bf16.mxu0 0
        %1855 = vmatpush1.bf16.msra.mxu0 %v1425
        %1856 = vmatprep.subr.bf16.mxu0 0
        %1857 = vmatpush1.bf16.msra.mxu0 %v1426
        %1858 = vmatprep.subr.bf16.mxu0 0
        %1859 = vmatpush1.bf16.msra.mxu0 %v1427
        %1860 = vmatprep.subr.bf16.mxu0 0
        %1861 = vmatpush1.bf16.msra.mxu0 %v1428
        %1862 = vmatprep.subr.bf16.mxu0 0
        %1863 = vmatpush1.bf16.msra.mxu0 %v1429
        %1864 = vmatprep.mubr.bf16.mxu0 %v875
        %1865 = vmatmul.mubr.bf16.gmra.mrb[0].mxu0 %v874
        %v1866 = vpop.f32.mrb[0].mxu0
        %v1867 = vadd.f32 %v1706, %v1866
        %v1868 = vpop.f32.mrb[0].mxu0
        %v1869 = vpop.f32.mrb[0].mxu0
        %v1870 = vadd.f32 %v1709, %v1869
        %v1871 = vpop.f32.mrb[0].mxu0
        %1872 = vmatprep.mubr.bf16.mxu0 %v883
        %1873 = vmatmul.mubr.bf16.gmra.mrb[0].mxu0 %v882
        %v1874 = vpop.f32.mrb[0].mxu0
        %v1875 = vadd.f32 %v1714, %v1874
        %v1876 = vpop.f32.mrb[0].mxu0
        %v1877 = vpop.f32.mrb[0].mxu0
        %v1878 = vadd.f32 %v1717, %v1877
        %v1879 = vpop.f32.mrb[0].mxu0
        %1880 = vmatprep.mubr.bf16.mxu0 %v891
        %1881 = vmatmul.mubr.bf16.gmra.mrb[0].mxu0 %v890
        %v1882 = vpop.f32.mrb[0].mxu0
        %v1883 = vadd.f32 %v1722, %v1882
        %v1884 = vpop.f32.mrb[0].mxu0
        %v1885 = vpop.f32.mrb[0].mxu0
        %v1886 = vadd.f32 %v1725, %v1885
        %v1887 = vpop.f32.mrb[0].mxu0
        %1888 = vmatprep.mubr.bf16.mxu0 %v899
        %1889 = vmatmul.mubr.bf16.gmra.mrb[0].mxu0 %v898
        %v1890 = vpop.f32.mrb[0].mxu0
        %v1891 = vadd.f32 %v1730, %v1890
        %v1892 = vpop.f32.mrb[0].mxu0
        %v1893 = vpop.f32.mrb[0].mxu0
        %v1894 = vadd.f32 %v1733, %v1893
        %v1895 = vpop.f32.mrb[0].mxu0
        %1896 = vmatprep.mubr.bf16.mxu0 %v907
        %1897 = vmatmul.mubr.bf16.gmra.mrb[0].mxu0 %v906
        %v1898 = vpop.f32.mrb[0].mxu0
        %v1899 = vadd.f32 %v1738, %v1898
        %v1900 = vpop.f32.mrb[0].mxu0
        %v1901 = vpop.f32.mrb[0].mxu0
        %v1902 = vadd.f32 %v1741, %v1901
        %v1903 = vpop.f32.mrb[0].mxu0
        %1904 = vmatprep.mubr.bf16.mxu0 %v915
        %1905 = vmatmul.mubr.bf16.gmra.mrb[0].mxu0 %v914
        %v1906 = vpop.f32.mrb[0].mxu0
        %v1907 = vadd.f32 %v1746, %v1906
        %v1908 = vpop.f32.mrb[0].mxu0
        %v1909 = vpop.f32.mrb[0].mxu0
        %v1910 = vadd.f32 %v1749, %v1909
        %v1911 = vpop.f32.mrb[0].mxu0
        %1912 = vmatprep.mubr.bf16.mxu0 %v923
        %1913 = vmatmul.mubr.bf16.gmra.mrb[0].mxu0 %v922
        %v1914 = vpop.f32.mrb[0].mxu0
        %v1915 = vadd.f32 %v1754, %v1914
        %v1916 = vpop.f32.mrb[0].mxu0
        %v1917 = vpop.f32.mrb[0].mxu0
        %v1918 = vadd.f32 %v1757, %v1917
        %v1919 = vpop.f32.mrb[0].mxu0
        %1920 = vmatprep.mubr.bf16.mxu0 %v931
        %1921 = vmatmul.mubr.bf16.gmra.mrb[0].mxu0 %v930
        %v1922 = vpop.f32.mrb[0].mxu0
        %v1923 = vadd.f32 %v1762, %v1922
        %v1924 = vpop.f32.mrb[0].mxu0
        %v1925 = vpop.f32.mrb[0].mxu0
        %v1926 = vadd.f32 %v1765, %v1925
        %v1927 = vpop.f32.mrb[0].mxu0
        %1928 = vmatprep.mubr.bf16.mxu0 %v939
        %1929 = vmatmul.mubr.bf16.gmra.mrb[0].mxu0 %v938
        %v1930 = vpop.f32.mrb[0].mxu0
        %v1931 = vadd.f32 %v1770, %v1930
        %v1932 = vpop.f32.mrb[0].mxu0
        %v1933 = vpop.f32.mrb[0].mxu0
        %v1934 = vadd.f32 %v1773, %v1933
        %v1935 = vpop.f32.mrb[0].mxu0
        %1936 = vmatprep.mubr.bf16.mxu0 %v947
        %1937 = vmatmul.mubr.bf16.gmra.mrb[0].mxu0 %v946
        %v1938 = vpop.f32.mrb[0].mxu0
        %v1939 = vadd.f32 %v1778, %v1938
        %v1940 = vpop.f32.mrb[0].mxu0
        %v1941 = vpop.f32.mrb[0].mxu0
        %v1942 = vadd.f32 %v1781, %v1941
        %v1943 = vpop.f32.mrb[0].mxu0
        %1944 = vmatprep.mubr.bf16.mxu0 %v955
        %1945 = vmatmul.mubr.bf16.gmra.mrb[0].mxu0 %v954
        %v1946 = vpop.f32.mrb[0].mxu0
        %v1947 = vadd.f32 %v1786, %v1946
        %v1948 = vpop.f32.mrb[0].mxu0
        %v1949 = vpop.f32.mrb[0].mxu0
        %v1950 = vadd.f32 %v1789, %v1949
        %v1951 = vpop.f32.mrb[0].mxu0
        %1952 = vmatprep.mubr.bf16.mxu0 %v963
        %1953 = vmatmul.mubr.bf16.gmra.mrb[0].mxu0 %v962
        %v1954 = vpop.f32.mrb[0].mxu0
        %v1955 = vadd.f32 %v1794, %v1954
        %v1956 = vpop.f32.mrb[0].mxu0
        %v1957 = vpop.f32.mrb[0].mxu0
        %v1958 = vadd.f32 %v1797, %v1957
        %v1959 = vpop.f32.mrb[0].mxu0
        %1960 = vmatprep.mubr.bf16.mxu0 %v971
        %1961 = vmatmul.mubr.bf16.gmra.mrb[0].mxu0 %v970
        %v1962 = vpop.f32.mrb[0].mxu0
        %v1963 = vadd.f32 %v1802, %v1962
        %v1964 = vpop.f32.mrb[0].mxu0
        %v1965 = vpop.f32.mrb[0].mxu0
        %v1966 = vadd.f32 %v1805, %v1965
        %v1967 = vpop.f32.mrb[0].mxu0
        %1968 = vmatprep.mubr.bf16.mxu0 %v979
        %1969 = vmatmul.mubr.bf16.gmra.mrb[0].mxu0 %v978
        %v1970 = vpop.f32.mrb[0].mxu0
        %v1971 = vadd.f32 %v1810, %v1970
        %v1972 = vpop.f32.mrb[0].mxu0
        %v1973 = vpop.f32.mrb[0].mxu0
        %v1974 = vadd.f32 %v1813, %v1973
        %v1975 = vpop.f32.mrb[0].mxu0
        %1976 = vmatprep.mubr.bf16.mxu0 %v987
        %1977 = vmatmul.mubr.bf16.gmra.mrb[0].mxu0 %v986
        %v1978 = vpop.f32.mrb[0].mxu0
        %v1979 = vadd.f32 %v1818, %v1978
        %v1980 = vpop.f32.mrb[0].mxu0
        %v1981 = vpop.f32.mrb[0].mxu0
        %v1982 = vadd.f32 %v1821, %v1981
        %v1983 = vpop.f32.mrb[0].mxu0
        %1984 = vmatprep.mubr.bf16.mxu0 %v995
        %1985 = vmatmul.mubr.bf16.gmra.mrb[0].mxu0 %v994
        %v1986 = vpop.f32.mrb[0].mxu0
        %v1987 = vadd.f32 %v1826, %v1986
        %v1988 = vpop.f32.mrb[0].mxu0
        %v1989 = vpop.f32.mrb[0].mxu0
        %v1990 = vadd.f32 %v1829, %v1989
        %v1991 = vpop.f32.mrb[0].mxu0
        %1992 = vdwg.mxu0
        %1993 = vmatprep.subr.bf16.mxu0 0
        %1994 = vmatpush1.bf16.msra.mxu0 %v1430
        %1995 = vmatprep.subr.bf16.mxu0 0
        %1996 = vmatpush1.bf16.msra.mxu0 %v1431
        %1997 = vmatprep.subr.bf16.mxu0 0
        %1998 = vmatpush1.bf16.msra.mxu0 %v1432
        %1999 = vmatprep.subr.bf16.mxu0 0
        %2000 = vmatpush1.bf16.msra.mxu0 %v1433
        %2001 = vmatprep.subr.bf16.mxu0 0
        %2002 = vmatpush1.bf16.msra.mxu0 %v1434
        %2003 = vmatprep.subr.bf16.mxu0 0
        %2004 = vmatpush1.bf16.msra.mxu0 %v1435
        %2005 = vmatprep.subr.bf16.mxu0 0
        %2006 = vmatpush1.bf16.msra.mxu0 %v1436
        %2007 = vmatprep.subr.bf16.mxu0 0
        %2008 = vmatpush1.bf16.msra.mxu0 %v1437
        %2009 = vmatprep.subr.bf16.mxu0 0
        %2010 = vmatpush1.bf16.msra.mxu0 %v1438
        %2011 = vmatprep.subr.bf16.mxu0 0
        %2012 = vmatpush1.bf16.msra.mxu0 %v1439
        %2013 = vmatprep.subr.bf16.mxu0 0
        %2014 = vmatpush1.bf16.msra.mxu0 %v1440
        %2015 = vmatprep.subr.bf16.mxu0 0
        %2016 = vmatpush1.bf16.msra.mxu0 %v1441
        %2017 = vmatprep.subr.bf16.mxu0 0
        %2018 = vmatpush1.bf16.msra.mxu0 %v1442
        %2019 = vmatprep.subr.bf16.mxu0 0
        %2020 = vmatpush1.bf16.msra.mxu0 %v1443
        %2021 = vmatprep.subr.bf16.mxu0 0
        %2022 = vmatpush1.bf16.msra.mxu0 %v1444
        %2023 = vmatprep.subr.bf16.mxu0 0
        %2024 = vmatpush1.bf16.msra.mxu0 %v1445
        %2025 = vmatprep.mubr.bf16.mxu0 %v877
        %2026 = vmatmul.mubr.bf16.gmra.mrb[0].mxu0 %v876
        %v2027 = vpop.f32.mrb[0].mxu0
        %v2028 = vadd.f32 %v1867, %v2027
        %v2029 = vpop.f32.mrb[0].mxu0
        %v2030 = vpop.f32.mrb[0].mxu0
        %v2031 = vadd.f32 %v1870, %v2030
        %v2032 = vpop.f32.mrb[0].mxu0
        %2033 = vmatprep.mubr.bf16.mxu0 %v885
        %2034 = vmatmul.mubr.bf16.gmra.mrb[0].mxu0 %v884
        %v2035 = vpop.f32.mrb[0].mxu0
        %v2036 = vadd.f32 %v1875, %v2035
        %v2037 = vpop.f32.mrb[0].mxu0
        %v2038 = vpop.f32.mrb[0].mxu0
        %v2039 = vadd.f32 %v1878, %v2038
        %v2040 = vpop.f32.mrb[0].mxu0
        %2041 = vmatprep.mubr.bf16.mxu0 %v893
        %2042 = vmatmul.mubr.bf16.gmra.mrb[0].mxu0 %v892
        %v2043 = vpop.f32.mrb[0].mxu0
        %v2044 = vadd.f32 %v1883, %v2043
        %v2045 = vpop.f32.mrb[0].mxu0
        %v2046 = vpop.f32.mrb[0].mxu0
        %v2047 = vadd.f32 %v1886, %v2046
        %v2048 = vpop.f32.mrb[0].mxu0
        %2049 = vmatprep.mubr.bf16.mxu0 %v901
        %2050 = vmatmul.mubr.bf16.gmra.mrb[0].mxu0 %v900
        %v2051 = vpop.f32.mrb[0].mxu0
        %v2052 = vadd.f32 %v1891, %v2051
        %v2053 = vpop.f32.mrb[0].mxu0
        %v2054 = vpop.f32.mrb[0].mxu0
        %v2055 = vadd.f32 %v1894, %v2054
        %v2056 = vpop.f32.mrb[0].mxu0
        %2057 = vmatprep.mubr.bf16.mxu0 %v909
        %2058 = vmatmul.mubr.bf16.gmra.mrb[0].mxu0 %v908
        %v2059 = vpop.f32.mrb[0].mxu0
        %v2060 = vadd.f32 %v1899, %v2059
        %v2061 = vpop.f32.mrb[0].mxu0
        %v2062 = vpop.f32.mrb[0].mxu0
        %v2063 = vadd.f32 %v1902, %v2062
        %v2064 = vpop.f32.mrb[0].mxu0
        %2065 = vmatprep.mubr.bf16.mxu0 %v917
        %2066 = vmatmul.mubr.bf16.gmra.mrb[0].mxu0 %v916
        %v2067 = vpop.f32.mrb[0].mxu0
        %v2068 = vadd.f32 %v1907, %v2067
        %v2069 = vpop.f32.mrb[0].mxu0
        %v2070 = vpop.f32.mrb[0].mxu0
        %v2071 = vadd.f32 %v1910, %v2070
        %v2072 = vpop.f32.mrb[0].mxu0
        %2073 = vmatprep.mubr.bf16.mxu0 %v925
        %2074 = vmatmul.mubr.bf16.gmra.mrb[0].mxu0 %v924
        %v2075 = vpop.f32.mrb[0].mxu0
        %v2076 = vadd.f32 %v1915, %v2075
        %v2077 = vpop.f32.mrb[0].mxu0
        %v2078 = vpop.f32.mrb[0].mxu0
        %v2079 = vadd.f32 %v1918, %v2078
        %v2080 = vpop.f32.mrb[0].mxu0
        %2081 = vmatprep.mubr.bf16.mxu0 %v933
        %2082 = vmatmul.mubr.bf16.gmra.mrb[0].mxu0 %v932
        %v2083 = vpop.f32.mrb[0].mxu0
        %v2084 = vadd.f32 %v1923, %v2083
        %v2085 = vpop.f32.mrb[0].mxu0
        %v2086 = vpop.f32.mrb[0].mxu0
        %v2087 = vadd.f32 %v1926, %v2086
        %v2088 = vpop.f32.mrb[0].mxu0
        %2089 = vmatprep.mubr.bf16.mxu0 %v941
        %2090 = vmatmul.mubr.bf16.gmra.mrb[0].mxu0 %v940
        %v2091 = vpop.f32.mrb[0].mxu0
        %v2092 = vadd.f32 %v1931, %v2091
        %v2093 = vpop.f32.mrb[0].mxu0
        %v2094 = vpop.f32.mrb[0].mxu0
        %v2095 = vadd.f32 %v1934, %v2094
        %v2096 = vpop.f32.mrb[0].mxu0
        %2097 = vmatprep.mubr.bf16.mxu0 %v949
        %2098 = vmatmul.mubr.bf16.gmra.mrb[0].mxu0 %v948
        %v2099 = vpop.f32.mrb[0].mxu0
        %v2100 = vadd.f32 %v1939, %v2099
        %v2101 = vpop.f32.mrb[0].mxu0
        %v2102 = vpop.f32.mrb[0].mxu0
        %v2103 = vadd.f32 %v1942, %v2102
        %v2104 = vpop.f32.mrb[0].mxu0
        %2105 = vmatprep.mubr.bf16.mxu0 %v957
        %2106 = vmatmul.mubr.bf16.gmra.mrb[0].mxu0 %v956
        %v2107 = vpop.f32.mrb[0].mxu0
        %v2108 = vadd.f32 %v1947, %v2107
        %v2109 = vpop.f32.mrb[0].mxu0
        %v2110 = vpop.f32.mrb[0].mxu0
        %v2111 = vadd.f32 %v1950, %v2110
        %v2112 = vpop.f32.mrb[0].mxu0
        %2113 = vmatprep.mubr.bf16.mxu0 %v965
        %2114 = vmatmul.mubr.bf16.gmra.mrb[0].mxu0 %v964
        %v2115 = vpop.f32.mrb[0].mxu0
        %v2116 = vadd.f32 %v1955, %v2115
        %v2117 = vpop.f32.mrb[0].mxu0
        %v2118 = vpop.f32.mrb[0].mxu0
        %v2119 = vadd.f32 %v1958, %v2118
        %v2120 = vpop.f32.mrb[0].mxu0
        %2121 = vmatprep.mubr.bf16.mxu0 %v973
        %2122 = vmatmul.mubr.bf16.gmra.mrb[0].mxu0 %v972
        %v2123 = vpop.f32.mrb[0].mxu0
        %v2124 = vadd.f32 %v1963, %v2123
        %v2125 = vpop.f32.mrb[0].mxu0
        %v2126 = vpop.f32.mrb[0].mxu0
        %v2127 = vadd.f32 %v1966, %v2126
        %v2128 = vpop.f32.mrb[0].mxu0
        %2129 = vmatprep.mubr.bf16.mxu0 %v981
        %2130 = vmatmul.mubr.bf16.gmra.mrb[0].mxu0 %v980
        %v2131 = vpop.f32.mrb[0].mxu0
        %v2132 = vadd.f32 %v1971, %v2131
        %v2133 = vpop.f32.mrb[0].mxu0
        %v2134 = vpop.f32.mrb[0].mxu0
        %v2135 = vadd.f32 %v1974, %v2134
        %v2136 = vpop.f32.mrb[0].mxu0
        %2137 = vmatprep.mubr.bf16.mxu0 %v989
        %2138 = vmatmul.mubr.bf16.gmra.mrb[0].mxu0 %v988
        %v2139 = vpop.f32.mrb[0].mxu0
        %v2140 = vadd.f32 %v1979, %v2139
        %v2141 = vpop.f32.mrb[0].mxu0
        %v2142 = vpop.f32.mrb[0].mxu0
        %v2143 = vadd.f32 %v1982, %v2142
        %v2144 = vpop.f32.mrb[0].mxu0
        %2145 = vmatprep.mubr.bf16.mxu0 %v997
        %2146 = vmatmul.mubr.bf16.gmra.mrb[0].mxu0 %v996
        %v2147 = vpop.f32.mrb[0].mxu0
        %v2148 = vadd.f32 %v1987, %v2147
        %v2149 = vpop.f32.mrb[0].mxu0
        %v2150 = vpop.f32.mrb[0].mxu0
        %v2151 = vadd.f32 %v1990, %v2150
        %v2152 = vpop.f32.mrb[0].mxu0
        %2153 = vdwg.mxu0
        %v2154 = vld [vmem:[%s225] sm:$0xff]
        %v2155 = vld [vmem:[%s225 + $0x8] sm:$0xff]
        %v2156 = vld [vmem:[%s225 + $0x10] sm:$0xff]
        %v2157 = vld [vmem:[%s225 + $0x18] sm:$0xff]
        %v2158 = vld [vmem:[%s225 + $0x20] sm:$0xff]
        %v2159 = vld [vmem:[%s225 + $0x28] sm:$0xff]
        %v2160 = vld [vmem:[%s225 + $0x30] sm:$0xff]
        %v2161 = vld [vmem:[%s225 + $0x38] sm:$0xff]
        %v2162 = vld [vmem:[%s225 + $0x40] sm:$0xff]
        %v2163 = vld [vmem:[%s225 + $0x48] sm:$0xff]
        %v2164 = vld [vmem:[%s225 + $0x50] sm:$0xff]
        %v2165 = vld [vmem:[%s225 + $0x58] sm:$0xff]
        %v2166 = vld [vmem:[%s225 + $0x60] sm:$0xff]
        %v2167 = vld [vmem:[%s225 + $0x68] sm:$0xff]
        %v2168 = vld [vmem:[%s225 + $0x70] sm:$0xff]
        %v2169 = vld [vmem:[%s225 + $0x78] sm:$0xff]
        %v2170 = vld [vmem:[%s225 + $0x80] sm:$0xff]
        %v2171 = vld [vmem:[%s225 + $0x88] sm:$0xff]
        %v2172 = vld [vmem:[%s225 + $0x90] sm:$0xff]
        %v2173 = vld [vmem:[%s225 + $0x98] sm:$0xff]
        %v2174 = vld [vmem:[%s225 + $0xa0] sm:$0xff]
        %v2175 = vld [vmem:[%s225 + $0xa8] sm:$0xff]
        %v2176 = vld [vmem:[%s225 + $0xb0] sm:$0xff]
        %v2177 = vld [vmem:[%s225 + $0xb8] sm:$0xff]
        %v2178 = vld [vmem:[%s225 + $0xc0] sm:$0xff]
        %v2179 = vld [vmem:[%s225 + $0xc8] sm:$0xff]
        %v2180 = vld [vmem:[%s225 + $0xd0] sm:$0xff]
        %v2181 = vld [vmem:[%s225 + $0xd8] sm:$0xff]
        %v2182 = vld [vmem:[%s225 + $0xe0] sm:$0xff]
        %v2183 = vld [vmem:[%s225 + $0xe8] sm:$0xff]
        %v2184 = vld [vmem:[%s225 + $0xf0] sm:$0xff]
        %v2185 = vld [vmem:[%s225 + $0xf8] sm:$0xff]
        %2187 = vset.pattern.permute.xlu0 0
        %2188 = vperm.xlu0 %2187, %v2154
        %v2189 = vpop.permute.xlu0 %2188
        %2192 = vset.pattern.permute.xlu0 0
        %2193 = vperm.xlu0 %2192, %v2155
        %v2194 = vpop.permute.xlu0 %2193
        %2197 = vset.pattern.permute.xlu0 0
        %2198 = vperm.xlu0 %2197, %v2156
        %v2199 = vpop.permute.xlu0 %2198
        %2202 = vset.pattern.permute.xlu0 0
        %2203 = vperm.xlu0 %2202, %v2157
        %v2204 = vpop.permute.xlu0 %2203
        %2207 = vset.pattern.permute.xlu0 0
        %2208 = vperm.xlu0 %2207, %v2158
        %v2209 = vpop.permute.xlu0 %2208
        %2212 = vset.pattern.permute.xlu0 0
        %2213 = vperm.xlu0 %2212, %v2159
        %v2214 = vpop.permute.xlu0 %2213
        %2217 = vset.pattern.permute.xlu0 0
        %2218 = vperm.xlu0 %2217, %v2160
        %v2219 = vpop.permute.xlu0 %2218
        %2222 = vset.pattern.permute.xlu0 0
        %2223 = vperm.xlu0 %2222, %v2161
        %v2224 = vpop.permute.xlu0 %2223
        %2227 = vset.pattern.permute.xlu0 0
        %2228 = vperm.xlu0 %2227, %v2162
        %v2229 = vpop.permute.xlu0 %2228
        %2232 = vset.pattern.permute.xlu0 0
        %2233 = vperm.xlu0 %2232, %v2163
        %v2234 = vpop.permute.xlu0 %2233
        %2237 = vset.pattern.permute.xlu0 0
        %2238 = vperm.xlu0 %2237, %v2164
        %v2239 = vpop.permute.xlu0 %2238
        %2242 = vset.pattern.permute.xlu0 0
        %2243 = vperm.xlu0 %2242, %v2165
        %v2244 = vpop.permute.xlu0 %2243
        %2247 = vset.pattern.permute.xlu0 0
        %2248 = vperm.xlu0 %2247, %v2166
        %v2249 = vpop.permute.xlu0 %2248
        %2252 = vset.pattern.permute.xlu0 0
        %2253 = vperm.xlu0 %2252, %v2167
        %v2254 = vpop.permute.xlu0 %2253
        %2257 = vset.pattern.permute.xlu0 0
        %2258 = vperm.xlu0 %2257, %v2168
        %v2259 = vpop.permute.xlu0 %2258
        %2262 = vset.pattern.permute.xlu0 0
        %2263 = vperm.xlu0 %2262, %v2169
        %v2264 = vpop.permute.xlu0 %2263
        %2267 = vset.pattern.permute.xlu0 0
        %2268 = vperm.xlu0 %2267, %v2170
        %v2269 = vpop.permute.xlu0 %2268
        %2272 = vset.pattern.permute.xlu0 0
        %2273 = vperm.xlu0 %2272, %v2171
        %v2274 = vpop.permute.xlu0 %2273
        %2277 = vset.pattern.permute.xlu0 0
        %2278 = vperm.xlu0 %2277, %v2172
        %v2279 = vpop.permute.xlu0 %2278
        %2282 = vset.pattern.permute.xlu0 0
        %2283 = vperm.xlu0 %2282, %v2173
        %v2284 = vpop.permute.xlu0 %2283
        %2287 = vset.pattern.permute.xlu0 0
        %2288 = vperm.xlu0 %2287, %v2174
        %v2289 = vpop.permute.xlu0 %2288
        %2292 = vset.pattern.permute.xlu0 0
        %2293 = vperm.xlu0 %2292, %v2175
        %v2294 = vpop.permute.xlu0 %2293
        %2297 = vset.pattern.permute.xlu0 0
        %2298 = vperm.xlu0 %2297, %v2176
        %v2299 = vpop.permute.xlu0 %2298
        %2302 = vset.pattern.permute.xlu0 0
        %2303 = vperm.xlu0 %2302, %v2177
        %v2304 = vpop.permute.xlu0 %2303
        %2307 = vset.pattern.permute.xlu0 0
        %2308 = vperm.xlu0 %2307, %v2178
        %v2309 = vpop.permute.xlu0 %2308
        %2312 = vset.pattern.permute.xlu0 0
        %2313 = vperm.xlu0 %2312, %v2179
        %v2314 = vpop.permute.xlu0 %2313
        %2317 = vset.pattern.permute.xlu0 0
        %2318 = vperm.xlu0 %2317, %v2180
        %v2319 = vpop.permute.xlu0 %2318
        %2322 = vset.pattern.permute.xlu0 0
        %2323 = vperm.xlu0 %2322, %v2181
        %v2324 = vpop.permute.xlu0 %2323
        %2327 = vset.pattern.permute.xlu0 0
        %2328 = vperm.xlu0 %2327, %v2182
        %v2329 = vpop.permute.xlu0 %2328
        %2332 = vset.pattern.permute.xlu0 0
        %2333 = vperm.xlu0 %2332, %v2183
        %v2334 = vpop.permute.xlu0 %2333
        %2337 = vset.pattern.permute.xlu0 0
        %2338 = vperm.xlu0 %2337, %v2184
        %v2339 = vpop.permute.xlu0 %2338
        %2342 = vset.pattern.permute.xlu0 0
        %2343 = vperm.xlu0 %2342, %v2185
        %v2344 = vpop.permute.xlu0 %2343
        %v2346 = vmul.f32 %v2028, %v2189
        %v2347 = vmul.f32 %v2031, %v2194
        %v2348 = vmul.f32 %v2036, %v2199
        %v2349 = vmul.f32 %v2039, %v2204
        %v2350 = vmul.f32 %v2044, %v2209
        %v2351 = vmul.f32 %v2047, %v2214
        %v2352 = vmul.f32 %v2052, %v2219
        %v2353 = vmul.f32 %v2055, %v2224
        %v2354 = vmul.f32 %v2060, %v2229
        %v2355 = vmul.f32 %v2063, %v2234
        %v2356 = vmul.f32 %v2068, %v2239
        %v2357 = vmul.f32 %v2071, %v2244
        %v2358 = vmul.f32 %v2076, %v2249
        %v2359 = vmul.f32 %v2079, %v2254
        %v2360 = vmul.f32 %v2084, %v2259
        %v2361 = vmul.f32 %v2087, %v2264
        %v2362 = vmul.f32 %v2092, %v2269
        %v2363 = vmul.f32 %v2095, %v2274
        %v2364 = vmul.f32 %v2100, %v2279
        %v2365 = vmul.f32 %v2103, %v2284
        %v2366 = vmul.f32 %v2108, %v2289
        %v2367 = vmul.f32 %v2111, %v2294
        %v2368 = vmul.f32 %v2116, %v2299
        %v2369 = vmul.f32 %v2119, %v2304
        %v2370 = vmul.f32 %v2124, %v2309
        %v2371 = vmul.f32 %v2127, %v2314
        %v2372 = vmul.f32 %v2132, %v2319
        %v2373 = vmul.f32 %v2135, %v2324
        %v2374 = vmul.f32 %v2140, %v2329
        %v2375 = vmul.f32 %v2143, %v2334
        %v2376 = vmul.f32 %v2148, %v2339
        %v2377 = vmul.f32 %v2151, %v2344
        %v2378 = vmax.f32 %v2346, 0.0
        %v2379 = vmax.f32 %v2347, 0.0
        %v2380 = vmax.f32 %v2348, 0.0
        %v2381 = vmax.f32 %v2349, 0.0
        %v2382 = vmax.f32 %v2350, 0.0
        %v2383 = vmax.f32 %v2351, 0.0
        %v2384 = vmax.f32 %v2352, 0.0
        %v2385 = vmax.f32 %v2353, 0.0
        %v2386 = vmax.f32 %v2354, 0.0
        %v2387 = vmax.f32 %v2355, 0.0
        %v2388 = vmax.f32 %v2356, 0.0
        %v2389 = vmax.f32 %v2357, 0.0
        %v2390 = vmax.f32 %v2358, 0.0
        %v2391 = vmax.f32 %v2359, 0.0
        %v2392 = vmax.f32 %v2360, 0.0
        %v2393 = vmax.f32 %v2361, 0.0
        %v2394 = vmax.f32 %v2362, 0.0
        %v2395 = vmax.f32 %v2363, 0.0
        %v2396 = vmax.f32 %v2364, 0.0
        %v2397 = vmax.f32 %v2365, 0.0
        %v2398 = vmax.f32 %v2366, 0.0
        %v2399 = vmax.f32 %v2367, 0.0
        %v2400 = vmax.f32 %v2368, 0.0
        %v2401 = vmax.f32 %v2369, 0.0
        %v2402 = vmax.f32 %v2370, 0.0
        %v2403 = vmax.f32 %v2371, 0.0
        %v2404 = vmax.f32 %v2372, 0.0
        %v2405 = vmax.f32 %v2373, 0.0
        %v2406 = vmax.f32 %v2374, 0.0
        %v2407 = vmax.f32 %v2375, 0.0
        %v2408 = vmax.f32 %v2376, 0.0
        %v2409 = vmax.f32 %v2377, 0.0
        %v2410 = vpack.c.bf16 %v2379, %v2378
        %v2411 = vpack.c.bf16 %v2381, %v2380
        %v2412 = vpack.c.bf16 %v2383, %v2382
        %v2413 = vpack.c.bf16 %v2385, %v2384
        %v2414 = vpack.c.bf16 %v2387, %v2386
        %v2415 = vpack.c.bf16 %v2389, %v2388
        %v2416 = vpack.c.bf16 %v2391, %v2390
        %v2417 = vpack.c.bf16 %v2393, %v2392
        %v2418 = vpack.c.bf16 %v2395, %v2394
        %v2419 = vpack.c.bf16 %v2397, %v2396
        %v2420 = vpack.c.bf16 %v2399, %v2398
        %v2421 = vpack.c.bf16 %v2401, %v2400
        %v2422 = vpack.c.bf16 %v2403, %v2402
        %v2423 = vpack.c.bf16 %v2405, %v2404
        %v2424 = vpack.c.bf16 %v2407, %v2406
        %v2425 = vpack.c.bf16 %v2409, %v2408
        %v2442 = vunpack.c.l.b16 %v2410
        %v2443 = vunpack.c.h.b16 %v2410
        %v2444 = vunpack.c.l.b16 %v2411
        %v2445 = vunpack.c.h.b16 %v2411
        %v2446 = vunpack.c.l.b16 %v2412
        %v2447 = vunpack.c.h.b16 %v2412
        %v2448 = vunpack.c.l.b16 %v2413
        %v2449 = vunpack.c.h.b16 %v2413
        %v2450 = vunpack.c.l.b16 %v2414
        %v2451 = vunpack.c.h.b16 %v2414
        %v2452 = vunpack.c.l.b16 %v2415
        %v2453 = vunpack.c.h.b16 %v2415
        %v2454 = vunpack.c.l.b16 %v2416
        %v2455 = vunpack.c.h.b16 %v2416
        %v2456 = vunpack.c.l.b16 %v2417
        %v2457 = vunpack.c.h.b16 %v2417
        %v2458 = vunpack.c.l.b16 %v2418
        %v2459 = vunpack.c.h.b16 %v2418
        %v2460 = vunpack.c.l.b16 %v2419
        %v2461 = vunpack.c.h.b16 %v2419
        %v2462 = vunpack.c.l.b16 %v2420
        %v2463 = vunpack.c.h.b16 %v2420
        %v2464 = vunpack.c.l.b16 %v2421
        %v2465 = vunpack.c.h.b16 %v2421
        %v2466 = vunpack.c.l.b16 %v2422
        %v2467 = vunpack.c.h.b16 %v2422
        %v2468 = vunpack.c.l.b16 %v2423
        %v2469 = vunpack.c.h.b16 %v2423
        %v2470 = vunpack.c.l.b16 %v2424
        %v2471 = vunpack.c.h.b16 %v2424
        %v2472 = vunpack.c.l.b16 %v2425
        %v2473 = vunpack.c.h.b16 %v2425
        %v2474 = vpack.c.b16 %v2442, %v2442
        %v2475 = vpack.c.b16 %v2443, %v2443
        %v2476 = vpack.c.b16 %v2444, %v2444
        %v2477 = vpack.c.b16 %v2445, %v2445
        %v2478 = vpack.c.b16 %v2446, %v2446
        %v2479 = vpack.c.b16 %v2447, %v2447
        %v2480 = vpack.c.b16 %v2448, %v2448
        %v2481 = vpack.c.b16 %v2449, %v2449
        %v2482 = vpack.c.b16 %v2450, %v2450
        %v2483 = vpack.c.b16 %v2451, %v2451
        %v2484 = vpack.c.b16 %v2452, %v2452
        %v2485 = vpack.c.b16 %v2453, %v2453
        %v2486 = vpack.c.b16 %v2454, %v2454
        %v2487 = vpack.c.b16 %v2455, %v2455
        %v2488 = vpack.c.b16 %v2456, %v2456
        %v2489 = vpack.c.b16 %v2457, %v2457
        %v2490 = vpack.c.b16 %v2458, %v2458
        %v2491 = vpack.c.b16 %v2459, %v2459
        %v2492 = vpack.c.b16 %v2460, %v2460
        %v2493 = vpack.c.b16 %v2461, %v2461
        %v2494 = vpack.c.b16 %v2462, %v2462
        %v2495 = vpack.c.b16 %v2463, %v2463
        %v2496 = vpack.c.b16 %v2464, %v2464
        %v2497 = vpack.c.b16 %v2465, %v2465
        %v2498 = vpack.c.b16 %v2466, %v2466
        %v2499 = vpack.c.b16 %v2467, %v2467
        %v2500 = vpack.c.b16 %v2468, %v2468
        %v2501 = vpack.c.b16 %v2469, %v2469
        %v2502 = vpack.c.b16 %v2470, %v2470
        %v2503 = vpack.c.b16 %v2471, %v2471
        %v2504 = vpack.c.b16 %v2472, %v2472
        %v2505 = vpack.c.b16 %v2473, %v2473
        %2538 = vst [vmem:[%s220] sm:$0xf] %v2474
        %2539 = vst [vmem:[%s220 + $0x4] sm:$0xf] %v2475
        %2540 = vst [vmem:[%s220 + $0x8] sm:$0xf] %v2476
        %2541 = vst [vmem:[%s220 + $0xc] sm:$0xf] %v2477
        %2542 = vst [vmem:[%s220 + $0x10] sm:$0xf] %v2478
        %2543 = vst [vmem:[%s220 + $0x14] sm:$0xf] %v2479
        %2544 = vst [vmem:[%s220 + $0x18] sm:$0xf] %v2480
        %2545 = vst [vmem:[%s220 + $0x1c] sm:$0xf] %v2481
        %2546 = vst [vmem:[%s220 + $0x20] sm:$0xf] %v2482
        %2547 = vst [vmem:[%s220 + $0x24] sm:$0xf] %v2483
        %2548 = vst [vmem:[%s220 + $0x28] sm:$0xf] %v2484
        %2549 = vst [vmem:[%s220 + $0x2c] sm:$0xf] %v2485
        %2550 = vst [vmem:[%s220 + $0x30] sm:$0xf] %v2486
        %2551 = vst [vmem:[%s220 + $0x34] sm:$0xf] %v2487
        %2552 = vst [vmem:[%s220 + $0x38] sm:$0xf] %v2488
        %2553 = vst [vmem:[%s220 + $0x3c] sm:$0xf] %v2489
        %2554 = vst [vmem:[%s220 + $0x40] sm:$0xf] %v2490
        %2555 = vst [vmem:[%s220 + $0x44] sm:$0xf] %v2491
        %2556 = vst [vmem:[%s220 + $0x48] sm:$0xf] %v2492
        %2557 = vst [vmem:[%s220 + $0x4c] sm:$0xf] %v2493
        %2558 = vst [vmem:[%s220 + $0x50] sm:$0xf] %v2494
        %2559 = vst [vmem:[%s220 + $0x54] sm:$0xf] %v2495
        %2560 = vst [vmem:[%s220 + $0x58] sm:$0xf] %v2496
        %2561 = vst [vmem:[%s220 + $0x5c] sm:$0xf] %v2497
        %2562 = vst [vmem:[%s220 + $0x60] sm:$0xf] %v2498
        %2563 = vst [vmem:[%s220 + $0x64] sm:$0xf] %v2499
        %2564 = vst [vmem:[%s220 + $0x68] sm:$0xf] %v2500
        %2565 = vst [vmem:[%s220 + $0x6c] sm:$0xf] %v2501
        %2566 = vst [vmem:[%s220 + $0x70] sm:$0xf] %v2502
        %2567 = vst [vmem:[%s220 + $0x74] sm:$0xf] %v2503
        %2568 = vst [vmem:[%s220 + $0x78] sm:$0xf] %v2504
        %2569 = vst [vmem:[%s220 + $0x7c] sm:$0xf] %v2505
        %s2570 = sand.u32 %s102, 1
        %s2571 = scalar_lea.sflag [#allocation4], %s2570
        %s2572 = sand.u32 %s102, 1
        %s2573 = smul.addr %s2572, 128
        %s2574 = scalar_lea.vmem [#allocation7], %s2573
        // Predicated region
        $region41: #{tpu_custom_call.1} parent=31 // pred_check
          %p2575 = pneg %p112
        $region42: #{tpu_custom_call.1} parent=31 // pred_check_branch
          %2577 = sbr.rel (%p2575) target = $region44
        $region43: #{tpu_custom_call.1} parent=31 // pred_region
          %s2578 = smul.u32 32, %s21
          %s2580 = ssub.s32 2048, 2048
          %2581 = vsyncadd %s2571, %s2580
          %s2582 = smul.addr %s2578, 64
          %s2583 = scalar_lea.hbm %s3, %s2582
          %s2584 = sshll.u32 %s2574, 4
          %s2585 = int_to_ptr.vmem [resolvable:$true] %s2584
          %2590 = dma.vmem_to_hbm [thread:$0]  %s2585, 2048, %s2583, %s2571, 64, 64, 4
        $region44: #{tpu_custom_call.1} parent=31 // pred_fallthru
          _
      $region32: #{tpu_custom_call.1} parent=5 // pred_fallthru
        _
      %p2591 = scmp.le.s32.totalorder 2, %s16
      // Predicated region
      $region45: #{tpu_custom_call.1} parent=5 // pred_check
        %p2592 = pneg %p2591
      $region46: #{tpu_custom_call.1} parent=5 // pred_check_branch
        %2594 = sbr.rel (%p2592) target = $region48
      $region47: #{tpu_custom_call.1} parent=5 // pred_region
        %s2595 = ssub.s32 %s16, 2
        // Predicated region
        $region49: #{tpu_custom_call.1} parent=47 // pred_check
          %p2596 = pneg %p118
        $region50: #{tpu_custom_call.1} parent=47 // pred_check_branch
          %2598 = sbr.rel (%p2596) target = $region52
        $region51: #{tpu_custom_call.1} parent=47 // pred_region
          %s2599 = sand.u32 %s103, 1
          %s2600 = scalar_lea.sflag [#allocation4], %s2599
          %s2601 = sand.u32 %s103, 1
          %s2602 = smul.addr %s2601, 128
          %s2603 = scalar_lea.vmem [#allocation7], %s2602
          %2604 = dma.done %s2600, 2048
        $region52: #{tpu_custom_call.1} parent=47 // pred_fallthru
          _
      $region48: #{tpu_custom_call.1} parent=5 // pred_fallthru
        _
    $region6: #{tpu_custom_call.1} parent=1 // loop_footer
      %s20 = sadd.s32 1, %s16
    $region7: #{tpu_custom_call.1} parent=1 // loop_footer_branch
      %15 = sbr.rel target = $region3
    $region8: #{tpu_custom_call.1} parent=1 // loop_exit
      _
    %2605 = vsyncpa [#allocation3], 1
    %s2606 = scalar_lea.sflag [#allocation3], 1
    %2607 = vsyncpa %s2606, 1
    %2608 = vsyncpa [#allocation6], 1
    %2609 = vsyncpa [#allocation4], 1
    %s2610 = scalar_lea.sflag [#allocation4], 1
    %2611 = vsyncpa %s2610, 1

</llo_original>
